<compile_context>
chip_gen: v5e
topology: v5e:2x2
jax: 0.10.0
libtpu: 0.0.40
codegen_flags: <defaults>
</compile_context>

<pallas_src>
import functools

import jax
import jax.numpy as jnp
from jax import lax
from jax.experimental import pallas as pl
from jax.experimental.pallas import tpu as pltpu


# ---------------------------------------------------------------------------
# Fused encoder kernel: conv stack (folded matmuls) + batched LSTM, one batch
# TILE (TB elements) per grid step.
# ---------------------------------------------------------------------------

def _erp_encoder_kernel(*refs, n_conv, hidden, seq_len, tb, slope):
    x_ref = refs[0]
    conv_refs = refs[1:1 + 3 * n_conv]
    wih_ref, whh_ref, bl_ref = refs[1 + 3 * n_conv:4 + 3 * n_conv]
    o_ref = refs[4 + 3 * n_conv]

    # (L*TB, F0) time-major row slab for this batch tile: row t*TB + b.
    a = x_ref[0]

    # Conv + bias + BN(eval) + LeakyReLU, each folded into one lane-dense matmul.
    for k in range(n_conv):
        w_ref, s_ref, b_ref = conv_refs[3 * k:3 * k + 3]
        y = jnp.dot(a.astype(jnp.bfloat16), w_ref[...],
                    preferred_element_type=jnp.float32)
        y = y * s_ref[...] + b_ref[...]
        a = jnp.maximum(y, slope * y)          # LeakyReLU(0.1), single vmax
        # TODO(synk): nn.Dropout is eval-mode identity; not applied.

    # LSTM (batch_first, single layer, zero init state).  Input projection for
    # all timesteps & all TB batch elements hoisted into one matmul.
    gx = jnp.dot(a.astype(jnp.bfloat16), wih_ref[...],
                 preferred_element_type=jnp.float32) + bl_ref[...]   # (L*TB, 4H)

    whh = whh_ref[...]                                               # (H, 4H) f32
    h = jnp.zeros((tb, hidden), jnp.float32)
    c = jnp.zeros((tb, hidden), jnp.float32)
    for t in range(seq_len):                  # short fixed trip count -> unrolled
        # Time-major rows: step t for all TB batch elements is contiguous.
        g = gx[t * tb:(t + 1) * tb, :] + jnp.dot(
            h, whh, preferred_element_type=jnp.float32)              # (TB, 4H)
        # Merged EUP pushes: one sigmoid over all gate lanes, one tanh on g.
        sg = jax.nn.sigmoid(g)
        i_g = sg[:, 0 * hidden:1 * hidden]
        f_g = sg[:, 1 * hidden:2 * hidden]
        g_g = jnp.tanh(g[:, 2 * hidden:3 * hidden])
        o_g = sg[:, 3 * hidden:4 * hidden]
        c = f_g * c + i_g * g_g
        h = o_g * jnp.tanh(c)

    o_ref[0] = h                               # coalesced (TB, H) store per tile


def erp_encoder_forward(folded, x, cfg, tb=None, target_rows=256):
    """x: (B, C*H*W, L) -> latent (B, dense_size)."""
    B, channels, L = x.shape
    F0 = channels
    H = cfg["dense_size"]
    n_conv = len(folded["conv_w"])

    if tb is None:
        # Fill the MXU M dim (~256 rows for v6e/v7x; pass target_rows=128 on
        # v5e) while keeping >= 2 grid tiles so both v7x TensorCores get work.
        tb = max(1, min(target_rows // L, pl.cdiv(B, 2)))
    tb = max(1, min(tb, B))
    nb = pl.cdiv(B, tb)
    b_pad = nb * tb
    if b_pad != B:
        x = jnp.concatenate(
            [x, jnp.zeros((b_pad - B, F0, L), x.dtype)], axis=0)

    # Model-boundary relayout only (one fused XLA op inside the jit):
    # native (B, F0, L) -> time-major-within-tile rows, row t*TB + b of tile i
    # is the channel-major flattened frame of batch i*TB+b at time t — exactly
    # the layout PyTorch's transpose(-2,-1).reshape(...) feeds the conv stack.
    x_rows = (x.reshape(nb, tb, F0, L)
               .transpose(0, 3, 1, 2)                 # (nb, L, TB, F0)
               .reshape(nb, L * tb, F0)
               .astype(jnp.float32))

    kern = functools.partial(_erp_encoder_kernel, n_conv=n_conv, hidden=H,
                             seq_len=L, tb=tb, slope=0.1)

    in_specs = [pl.BlockSpec((1, L * tb, F0), lambda i: (i, 0, 0))]
    inputs = [x_rows]
    for w, s, bb in zip(folded["conv_w"], folded["conv_scale"], folded["conv_bias"]):
        in_specs += [pl.BlockSpec(w.shape, lambda i: (0, 0)),
                     pl.BlockSpec(s.shape, lambda i: (0, 0)),
                     pl.BlockSpec(bb.shape, lambda i: (0, 0))]
        inputs += [w, s, bb]
    in_specs += [pl.BlockSpec(folded["w_ih"].shape, lambda i: (0, 0)),
                 pl.BlockSpec(folded["w_hh"].shape, lambda i: (0, 0)),
                 pl.BlockSpec(folded["b_l"].shape, lambda i: (0, 0))]
    inputs += [folded["w_ih"], folded["w_hh"], folded["b_l"]]

    out = pl.pallas_call(
        kern,
        out_shape=jax.ShapeDtypeStruct((nb, tb, H), jnp.float32),
        grid=(nb,),
        in_specs=in_specs,
        out_specs=pl.BlockSpec((1, tb, H), lambda i: (i, 0, 0)),
        compiler_params=pltpu.CompilerParams(dimension_semantics=("parallel",)),
    )(*inputs)
    return out.reshape(b_pad, H)[:B]


# ---------------------------------------------------------------------------
# One-time parameter folding: Conv2d(same) + bias + BN(eval) -> (WM, scale, bias)
# acting on channel-major flattened activations.
# ---------------------------------------------------------------------------

def fold_params(params, cfg, eps=1e-5):
    Cin, Hh, Ww = cfg["channel_shape_chw"]
    HW = Hh * Ww

    conv_w, conv_scale, conv_bias = [], [], []
    for layer in params["enc_layers"]:
        for sub in layer:
            w = sub["w"]                              # (Co, Ci, KH, KW), odd kernel
            Co, Ci, KH, KW = w.shape
            ph, pw = KH // 2, KW // 2
            # Eh[a, hi, ho] = 1 iff hi == ho + a - ph  (shifted identity per tap).
            Eh = jnp.stack([jnp.eye(Hh, Hh, k=ph - a, dtype=jnp.float32)
                            for a in range(KH)])
            Ew = jnp.stack([jnp.eye(Ww, Ww, k=pw - b, dtype=jnp.float32)
                            for b in range(KW)])
            # WM[ci*HW+hi*W+wi, co*HW+ho*W+wo] = w[co,ci,hi-ho+ph,wi-wo+pw] (0 outside)
            wm6 = jnp.einsum("ocab,axy,bzu->cxzoyu", w, Eh, Ew)
            wm = wm6.reshape(Ci * HW, Co * HW)

            s = sub["gamma"] / jnp.sqrt(sub["var"] + eps)        # BN(eval) fold
            bias = (sub["b"] - sub["mean"]) * s + sub["beta"]

            conv_w.append(wm.astype(jnp.bfloat16))
            conv_scale.append(jnp.repeat(s, HW).reshape(1, Co * HW).astype(jnp.float32))
            conv_bias.append(jnp.repeat(bias, HW).reshape(1, Co * HW).astype(jnp.float32))

    H = params["enc_lstm"]["w_hh"].shape[0]
    return dict(conv_w=conv_w, conv_scale=conv_scale, conv_bias=conv_bias,
                w_ih=params["enc_lstm"]["w_ih"].astype(jnp.bfloat16),
                # Recurrent weight stays f32 (tiny matmul, avoids bf16 rounding
                # accumulating through the 8-step recurrence).
                w_hh=params["enc_lstm"]["w_hh"].astype(jnp.float32),
                b_l=params["enc_lstm"]["b"].reshape(1, 4 * H).astype(jnp.float32))


# ---------------------------------------------------------------------------
# Pure-JAX reference (for in-script verification)
# ---------------------------------------------------------------------------

def reference_forward(params, x, cfg, eps=1e-5, slope=0.1):
    B, channels, L = x.shape
    Cin, Hh, Ww = cfg["channel_shape_chw"]
    z = jnp.transpose(x, (0, 2, 1)).reshape(B * L, Cin, Hh, Ww)
    for layer in params["enc_layers"]:
        for sub in layer:
            y = lax.conv_general_dilated(z, sub["w"], (1, 1), "SAME",
                                         dimension_numbers=("NCHW", "OIHW", "NCHW"))
            y = y + sub["b"][None, :, None, None]
            s = sub["gamma"] / jnp.sqrt(sub["var"] + eps)
            y = ((y - sub["mean"][None, :, None, None]) * s[None, :, None, None]
                 + sub["beta"][None, :, None, None])
            z = jnp.where(y >= 0.0, y, slope * y)
    feats = z.reshape(B, L, -1)
    H = params["enc_lstm"]["w_hh"].shape[0]
    w_ih, w_hh, bias = (params["enc_lstm"]["w_ih"], params["enc_lstm"]["w_hh"],
                        params["enc_lstm"]["b"])
    h = jnp.zeros((B, H), jnp.float32)
    c = jnp.zeros((B, H), jnp.float32)
    for t in range(L):
        g = feats[:, t, :] @ w_ih + h @ w_hh + bias
        i_g = jax.nn.sigmoid(g[:, 0 * H:1 * H])
        f_g = jax.nn.sigmoid(g[:, 1 * H:2 * H])
        g_g = jnp.tanh(g[:, 2 * H:3 * H])
        o_g = jax.nn.sigmoid(g[:, 3 * H:4 * H])
        c = f_g * c + i_g * g_g
        h = o_g * jnp.tanh(c)
    return h


# ---------------------------------------------------------------------------
# Deterministic parameter construction (shapes follow ERPEncoder.__init__)
# ---------------------------------------------------------------------------

def build_params(key):
    L = 8
    Cin, Hh, Ww = 1, 4, 4            # cnn_input_shape = (L, 1, 4, 4)
    depth = 2
    sublayers = 2
    init_conv = 4
    dense = 16

    keys = iter(jax.random.split(key, 128))

    def nrm(shape, scale=0.1):
        return scale * jax.random.normal(next(keys), shape, dtype=jnp.float32)

    def bn(n):
        return dict(gamma=1.0 + nrm((n,)), beta=nrm((n,)),
                    mean=nrm((n,)), var=1.0 + jnp.abs(nrm((n,))))

    enc_layers = []
    cnn_chns = init_conv
    in_ch = Cin
    for _ in range(depth):
        subs = []
        cur = in_ch
        for i in range(sublayers):
            out = 2 * cnn_chns if i == 0 else cnn_chns
            subs.append(dict(w=nrm((out, cur, 3, 3)), b=nrm((out,)), **bn(out)))
            cur = out
        enc_layers.append(subs)
        in_ch = cnn_chns             # ERPEncLayer.out_channels = conv_size
        cnn_chns *= 2
    rnn_in = in_ch * Hh * Ww

    enc_lstm = dict(w_ih=nrm((rnn_in, 4 * dense)),     # W_ih^T
                    w_hh=nrm((dense, 4 * dense)),      # W_hh^T
                    b=nrm((4 * dense,)))               # b_ih + b_hh combined

    params = dict(enc_layers=enc_layers, enc_lstm=enc_lstm)
    cfg = dict(channel_shape_chw=(Cin, Hh, Ww), L=L, channels=Cin * Hh * Ww,
               dense_size=dense)
    return params, cfg


if __name__ == "__main__":
    key = jax.random.PRNGKey(0)
    pkey, xkey, xkey2 = jax.random.split(key, 3)
    params, cfg = build_params(pkey)
    folded = fold_params(params, cfg)
    fwd = jax.jit(functools.partial(erp_encoder_forward, cfg=cfg))

    # Small demo batch: (batch, channels, time) = (2, 16, 8); channels = 1*4*4.
    B = 2
    x = jax.random.normal(xkey, (B, cfg["channels"], cfg["L"]), dtype=jnp.float32)
    latent = fwd(folded, x)
    jax.block_until_ready(latent)
    assert latent.shape == (B, cfg["dense_size"]), latent.shape
    assert bool(jnp.all(jnp.isfinite(latent)))
    err = float(jnp.max(jnp.abs(latent - reference_forward(params, x, cfg))))
    assert err < 5e-2, f"max abs error vs reference (B=2): {err}"

    # Larger batch exercises the row-blocked / batch-vectorized LSTM path (TB>1).
    B2 = 8
    x2 = jax.random.normal(xkey2, (B2, cfg["channels"], cfg["L"]), dtype=jnp.float32)
    latent2 = fwd(folded, x2)
    jax.block_until_ready(latent2)
    assert latent2.shape == (B2, cfg["dense_size"]), latent2.shape
    err2 = float(jnp.max(jnp.abs(latent2 - reference_forward(params, x2, cfg))))
    assert err2 < 5e-2, f"max abs error vs reference (B=8): {err2}"

    print("KERNEL_OK")
</pallas_src>

<mosaic_0001>
module attributes {stable_mosaic.version = 11 : i64} {
  func.func @_erp_encoder_kernel(%arg0: i32, %arg1: memref<1x8x16xf32, #tpu.memory_space<vmem>>, %arg2: memref<16x128xbf16, #tpu.memory_space<vmem>>, %arg3: memref<1x128xf32, #tpu.memory_space<vmem>>, %arg4: memref<1x128xf32, #tpu.memory_space<vmem>>, %arg5: memref<128x64xbf16, #tpu.memory_space<vmem>>, %arg6: memref<1x64xf32, #tpu.memory_space<vmem>>, %arg7: memref<1x64xf32, #tpu.memory_space<vmem>>, %arg8: memref<64x256xbf16, #tpu.memory_space<vmem>>, %arg9: memref<1x256xf32, #tpu.memory_space<vmem>>, %arg10: memref<1x256xf32, #tpu.memory_space<vmem>>, %arg11: memref<256x128xbf16, #tpu.memory_space<vmem>>, %arg12: memref<1x128xf32, #tpu.memory_space<vmem>>, %arg13: memref<1x128xf32, #tpu.memory_space<vmem>>, %arg14: memref<128x64xbf16, #tpu.memory_space<vmem>>, %arg15: memref<16x64xf32, #tpu.memory_space<vmem>>, %arg16: memref<1x64xf32, #tpu.memory_space<vmem>>, %arg17: memref<1x1x16xf32, #tpu.memory_space<vmem>>) attributes {dimension_semantics = [#tpu.dimension_semantics<parallel>], iteration_bounds = array<i64: 2>, scalar_prefetch = 0 : i64, scratch_operands = 0 : i64, tpu.core_type = #tpu.core_type<tc>, window_params = [{transform_indices = @transform_0, window_bounds = array<i64: 1, 8, 16>}, {pipeline_mode = #tpu.pipeline_mode<synchronous>, transform_indices = @transform_1, window_bounds = array<i64: 16, 128>}, {pipeline_mode = #tpu.pipeline_mode<synchronous>, transform_indices = @transform_2, window_bounds = array<i64: 1, 128>}, {pipeline_mode = #tpu.pipeline_mode<synchronous>, transform_indices = @transform_3, window_bounds = array<i64: 1, 128>}, {pipeline_mode = #tpu.pipeline_mode<synchronous>, transform_indices = @transform_4, window_bounds = array<i64: 128, 64>}, {pipeline_mode = #tpu.pipeline_mode<synchronous>, transform_indices = @transform_5, window_bounds = array<i64: 1, 64>}, {pipeline_mode = #tpu.pipeline_mode<synchronous>, transform_indices = @transform_6, window_bounds = array<i64: 1, 64>}, {pipeline_mode = #tpu.pipeline_mode<synchronous>, transform_indices = @transform_7, window_bounds = array<i64: 64, 256>}, {pipeline_mode = #tpu.pipeline_mode<synchronous>, transform_indices = @transform_8, window_bounds = array<i64: 1, 256>}, {pipeline_mode = #tpu.pipeline_mode<synchronous>, transform_indices = @transform_9, window_bounds = array<i64: 1, 256>}, {pipeline_mode = #tpu.pipeline_mode<synchronous>, transform_indices = @transform_10, window_bounds = array<i64: 256, 128>}, {pipeline_mode = #tpu.pipeline_mode<synchronous>, transform_indices = @transform_11, window_bounds = array<i64: 1, 128>}, {pipeline_mode = #tpu.pipeline_mode<synchronous>, transform_indices = @transform_12, window_bounds = array<i64: 1, 128>}, {pipeline_mode = #tpu.pipeline_mode<synchronous>, transform_indices = @transform_13, window_bounds = array<i64: 128, 64>}, {pipeline_mode = #tpu.pipeline_mode<synchronous>, transform_indices = @transform_14, window_bounds = array<i64: 16, 64>}, {pipeline_mode = #tpu.pipeline_mode<synchronous>, transform_indices = @transform_15, window_bounds = array<i64: 1, 64>}, {transform_indices = @transform_16, window_bounds = array<i64: 1, 1, 16>}]} {
    %c0 = arith.constant 0 : index
    %c0_0 = arith.constant 0 : index
    %c0_1 = arith.constant 0 : index
    %0 = vector.load %arg1[%c0, %c0_0, %c0_1] : memref<1x8x16xf32, #tpu.memory_space<vmem>>, vector<1x8x16xf32>
    %1 = vector.shape_cast %0 : vector<1x8x16xf32> to vector<8x16xf32>
    %2 = arith.truncf %1 : vector<8x16xf32> to vector<8x16xbf16>
    %c0_2 = arith.constant 0 : index
    %c0_3 = arith.constant 0 : index
    %3 = vector.load %arg2[%c0_2, %c0_3] : memref<16x128xbf16, #tpu.memory_space<vmem>>, vector<16x128xbf16>
    %cst = arith.constant dense<0.000000e+00> : vector<8x128xf32>
    %4 = tpu.matmul %2, %3, %cst {dimension_numbers = #tpu.dot_dimension_numbers<[1], [0], [0], [1], [0, 0, 1, 1], [], []>} : vector<8x16xbf16>, vector<16x128xbf16>, vector<8x128xf32> -> vector<8x128xf32>
    %c0_4 = arith.constant 0 : index
    %c0_5 = arith.constant 0 : index
    %5 = vector.load %arg3[%c0_4, %c0_5] : memref<1x128xf32, #tpu.memory_space<vmem>>, vector<1x128xf32>
    %6 = vector.broadcast %5 : vector<1x128xf32> to vector<8x128xf32>
    %7 = arith.mulf %4, %6 : vector<8x128xf32>
    %c0_6 = arith.constant 0 : index
    %c0_7 = arith.constant 0 : index
    %8 = vector.load %arg4[%c0_6, %c0_7] : memref<1x128xf32, #tpu.memory_space<vmem>>, vector<1x128xf32>
    %9 = vector.broadcast %8 : vector<1x128xf32> to vector<8x128xf32>
    %10 = arith.addf %7, %9 : vector<8x128xf32>
    %cst_8 = arith.constant 1.000000e-01 : f32
    %11 = vector.broadcast %cst_8 : f32 to vector<8x128xf32>
    %12 = arith.mulf %11, %10 : vector<8x128xf32>
    %13 = arith.maximumf %10, %12 : vector<8x128xf32>
    %14 = arith.truncf %13 : vector<8x128xf32> to vector<8x128xbf16>
    %c0_9 = arith.constant 0 : index
    %c0_10 = arith.constant 0 : index
    %15 = vector.load %arg5[%c0_9, %c0_10] : memref<128x64xbf16, #tpu.memory_space<vmem>>, vector<128x64xbf16>
    %cst_11 = arith.constant dense<0.000000e+00> : vector<8x64xf32>
    %16 = tpu.matmul %14, %15, %cst_11 {dimension_numbers = #tpu.dot_dimension_numbers<[1], [0], [0], [1], [0, 0, 1, 1], [], []>} : vector<8x128xbf16>, vector<128x64xbf16>, vector<8x64xf32> -> vector<8x64xf32>
    %c0_12 = arith.constant 0 : index
    %c0_13 = arith.constant 0 : index
    %17 = vector.load %arg6[%c0_12, %c0_13] : memref<1x64xf32, #tpu.memory_space<vmem>>, vector<1x64xf32>
    %18 = vector.broadcast %17 : vector<1x64xf32> to vector<8x64xf32>
    %19 = arith.mulf %16, %18 : vector<8x64xf32>
    %c0_14 = arith.constant 0 : index
    %c0_15 = arith.constant 0 : index
    %20 = vector.load %arg7[%c0_14, %c0_15] : memref<1x64xf32, #tpu.memory_space<vmem>>, vector<1x64xf32>
    %21 = vector.broadcast %20 : vector<1x64xf32> to vector<8x64xf32>
    %22 = arith.addf %19, %21 : vector<8x64xf32>
    %cst_16 = arith.constant 1.000000e-01 : f32
    %23 = vector.broadcast %cst_16 : f32 to vector<8x64xf32>
    %24 = arith.mulf %23, %22 : vector<8x64xf32>
    %25 = arith.maximumf %22, %24 : vector<8x64xf32>
    %26 = arith.truncf %25 : vector<8x64xf32> to vector<8x64xbf16>
    %c0_17 = arith.constant 0 : index
    %c0_18 = arith.constant 0 : index
    %27 = vector.load %arg8[%c0_17, %c0_18] : memref<64x256xbf16, #tpu.memory_space<vmem>>, vector<64x256xbf16>
    %cst_19 = arith.constant dense<0.000000e+00> : vector<8x256xf32>
    %28 = tpu.matmul %26, %27, %cst_19 {dimension_numbers = #tpu.dot_dimension_numbers<[1], [0], [0], [1], [0, 0, 1, 1], [], []>} : vector<8x64xbf16>, vector<64x256xbf16>, vector<8x256xf32> -> vector<8x256xf32>
    %c0_20 = arith.constant 0 : index
    %c0_21 = arith.constant 0 : index
    %29 = vector.load %arg9[%c0_20, %c0_21] : memref<1x256xf32, #tpu.memory_space<vmem>>, vector<1x256xf32>
    %30 = vector.broadcast %29 : vector<1x256xf32> to vector<8x256xf32>
    %31 = arith.mulf %28, %30 : vector<8x256xf32>
    %c0_22 = arith.constant 0 : index
    %c0_23 = arith.constant 0 : index
    %32 = vector.load %arg10[%c0_22, %c0_23] : memref<1x256xf32, #tpu.memory_space<vmem>>, vector<1x256xf32>
    %33 = vector.broadcast %32 : vector<1x256xf32> to vector<8x256xf32>
    %34 = arith.addf %31, %33 : vector<8x256xf32>
    %cst_24 = arith.constant 1.000000e-01 : f32
    %35 = vector.broadcast %cst_24 : f32 to vector<8x256xf32>
    %36 = arith.mulf %35, %34 : vector<8x256xf32>
    %37 = arith.maximumf %34, %36 : vector<8x256xf32>
    %38 = arith.truncf %37 : vector<8x256xf32> to vector<8x256xbf16>
    %c0_25 = arith.constant 0 : index
    %c0_26 = arith.constant 0 : index
    %39 = vector.load %arg11[%c0_25, %c0_26] : memref<256x128xbf16, #tpu.memory_space<vmem>>, vector<256x128xbf16>
    %cst_27 = arith.constant dense<0.000000e+00> : vector<8x128xf32>
    %40 = tpu.matmul %38, %39, %cst_27 {dimension_numbers = #tpu.dot_dimension_numbers<[1], [0], [0], [1], [0, 0, 1, 1], [], []>} : vector<8x256xbf16>, vector<256x128xbf16>, vector<8x128xf32> -> vector<8x128xf32>
    %c0_28 = arith.constant 0 : index
    %c0_29 = arith.constant 0 : index
    %41 = vector.load %arg12[%c0_28, %c0_29] : memref<1x128xf32, #tpu.memory_space<vmem>>, vector<1x128xf32>
    %42 = vector.broadcast %41 : vector<1x128xf32> to vector<8x128xf32>
    %43 = arith.mulf %40, %42 : vector<8x128xf32>
    %c0_30 = arith.constant 0 : index
    %c0_31 = arith.constant 0 : index
    %44 = vector.load %arg13[%c0_30, %c0_31] : memref<1x128xf32, #tpu.memory_space<vmem>>, vector<1x128xf32>
    %45 = vector.broadcast %44 : vector<1x128xf32> to vector<8x128xf32>
    %46 = arith.addf %43, %45 : vector<8x128xf32>
    %cst_32 = arith.constant 1.000000e-01 : f32
    %47 = vector.broadcast %cst_32 : f32 to vector<8x128xf32>
    %48 = arith.mulf %47, %46 : vector<8x128xf32>
    %49 = arith.maximumf %46, %48 : vector<8x128xf32>
    %50 = arith.truncf %49 : vector<8x128xf32> to vector<8x128xbf16>
    %c0_33 = arith.constant 0 : index
    %c0_34 = arith.constant 0 : index
    %51 = vector.load %arg14[%c0_33, %c0_34] : memref<128x64xbf16, #tpu.memory_space<vmem>>, vector<128x64xbf16>
    %cst_35 = arith.constant dense<0.000000e+00> : vector<8x64xf32>
    %52 = tpu.matmul %50, %51, %cst_35 {dimension_numbers = #tpu.dot_dimension_numbers<[1], [0], [0], [1], [0, 0, 1, 1], [], []>} : vector<8x128xbf16>, vector<128x64xbf16>, vector<8x64xf32> -> vector<8x64xf32>
    %c0_36 = arith.constant 0 : index
    %c0_37 = arith.constant 0 : index
    %53 = vector.load %arg16[%c0_36, %c0_37] : memref<1x64xf32, #tpu.memory_space<vmem>>, vector<1x64xf32>
    %54 = vector.broadcast %53 : vector<1x64xf32> to vector<8x64xf32>
    %55 = arith.addf %52, %54 : vector<8x64xf32>
    %c0_38 = arith.constant 0 : index
    %c0_39 = arith.constant 0 : index
    %56 = vector.load %arg15[%c0_38, %c0_39] : memref<16x64xf32, #tpu.memory_space<vmem>>, vector<16x64xf32>
    %cst_40 = arith.constant 0.000000e+00 : f32
    %57 = vector.broadcast %cst_40 : f32 to vector<1x16xf32>
    %cst_41 = arith.constant 0.000000e+00 : f32
    %58 = vector.broadcast %cst_41 : f32 to vector<1x16xf32>
    %59 = vector.extract_strided_slice %55 {offsets = [0, 0], sizes = [1, 64], strides = [1, 1]} : vector<8x64xf32> to vector<1x64xf32>
    %cst_42 = arith.constant dense<0.000000e+00> : vector<1x64xf32>
    %60 = tpu.matmul %57, %56, %cst_42 {dimension_numbers = #tpu.dot_dimension_numbers<[1], [0], [0], [1], [0, 0, 1, 1], [], []>} : vector<1x16xf32>, vector<16x64xf32>, vector<1x64xf32> -> vector<1x64xf32>
    %61 = arith.addf %59, %60 : vector<1x64xf32>
    %62 = arith.negf %61 : vector<1x64xf32>
    %63 = math.exp %62 : vector<1x64xf32>
    %cst_43 = arith.constant 1.000000e+00 : f32
    %64 = vector.broadcast %cst_43 : f32 to vector<1x64xf32>
    %65 = arith.addf %64, %63 : vector<1x64xf32>
    %66 = arith.divf %64, %65 : vector<1x64xf32>
    %67 = vector.extract_strided_slice %66 {offsets = [0, 0], sizes = [1, 16], strides = [1, 1]} : vector<1x64xf32> to vector<1x16xf32>
    %68 = vector.extract_strided_slice %66 {offsets = [0, 16], sizes = [1, 16], strides = [1, 1]} : vector<1x64xf32> to vector<1x16xf32>
    %69 = vector.extract_strided_slice %61 {offsets = [0, 32], sizes = [1, 16], strides = [1, 1]} : vector<1x64xf32> to vector<1x16xf32>
    %70 = math.tanh %69 : vector<1x16xf32>
    %71 = vector.extract_strided_slice %66 {offsets = [0, 48], sizes = [1, 16], strides = [1, 1]} : vector<1x64xf32> to vector<1x16xf32>
    %72 = arith.mulf %68, %58 : vector<1x16xf32>
    %73 = arith.mulf %67, %70 : vector<1x16xf32>
    %74 = arith.addf %72, %73 : vector<1x16xf32>
    %75 = math.tanh %74 : vector<1x16xf32>
    %76 = arith.mulf %71, %75 : vector<1x16xf32>
    %77 = vector.extract_strided_slice %55 {offsets = [1, 0], sizes = [1, 64], strides = [1, 1]} : vector<8x64xf32> to vector<1x64xf32>
    %cst_44 = arith.constant dense<0.000000e+00> : vector<1x64xf32>
    %78 = tpu.matmul %76, %56, %cst_44 {dimension_numbers = #tpu.dot_dimension_numbers<[1], [0], [0], [1], [0, 0, 1, 1], [], []>} : vector<1x16xf32>, vector<16x64xf32>, vector<1x64xf32> -> vector<1x64xf32>
    %79 = arith.addf %77, %78 : vector<1x64xf32>
    %80 = arith.negf %79 : vector<1x64xf32>
    %81 = math.exp %80 : vector<1x64xf32>
    %cst_45 = arith.constant 1.000000e+00 : f32
    %82 = vector.broadcast %cst_45 : f32 to vector<1x64xf32>
    %83 = arith.addf %82, %81 : vector<1x64xf32>
    %84 = arith.divf %82, %83 : vector<1x64xf32>
    %85 = vector.extract_strided_slice %84 {offsets = [0, 0], sizes = [1, 16], strides = [1, 1]} : vector<1x64xf32> to vector<1x16xf32>
    %86 = vector.extract_strided_slice %84 {offsets = [0, 16], sizes = [1, 16], strides = [1, 1]} : vector<1x64xf32> to vector<1x16xf32>
    %87 = vector.extract_strided_slice %79 {offsets = [0, 32], sizes = [1, 16], strides = [1, 1]} : vector<1x64xf32> to vector<1x16xf32>
    %88 = math.tanh %87 : vector<1x16xf32>
    %89 = vector.extract_strided_slice %84 {offsets = [0, 48], sizes = [1, 16], strides = [1, 1]} : vector<1x64xf32> to vector<1x16xf32>
    %90 = arith.mulf %86, %74 : vector<1x16xf32>
    %91 = arith.mulf %85, %88 : vector<1x16xf32>
    %92 = arith.addf %90, %91 : vector<1x16xf32>
    %93 = math.tanh %92 : vector<1x16xf32>
    %94 = arith.mulf %89, %93 : vector<1x16xf32>
    %95 = vector.extract_strided_slice %55 {offsets = [2, 0], sizes = [1, 64], strides = [1, 1]} : vector<8x64xf32> to vector<1x64xf32>
    %cst_46 = arith.constant dense<0.000000e+00> : vector<1x64xf32>
    %96 = tpu.matmul %94, %56, %cst_46 {dimension_numbers = #tpu.dot_dimension_numbers<[1], [0], [0], [1], [0, 0, 1, 1], [], []>} : vector<1x16xf32>, vector<16x64xf32>, vector<1x64xf32> -> vector<1x64xf32>
    %97 = arith.addf %95, %96 : vector<1x64xf32>
    %98 = arith.negf %97 : vector<1x64xf32>
    %99 = math.exp %98 : vector<1x64xf32>
    %cst_47 = arith.constant 1.000000e+00 : f32
    %100 = vector.broadcast %cst_47 : f32 to vector<1x64xf32>
    %101 = arith.addf %100, %99 : vector<1x64xf32>
    %102 = arith.divf %100, %101 : vector<1x64xf32>
    %103 = vector.extract_strided_slice %102 {offsets = [0, 0], sizes = [1, 16], strides = [1, 1]} : vector<1x64xf32> to vector<1x16xf32>
    %104 = vector.extract_strided_slice %102 {offsets = [0, 16], sizes = [1, 16], strides = [1, 1]} : vector<1x64xf32> to vector<1x16xf32>
    %105 = vector.extract_strided_slice %97 {offsets = [0, 32], sizes = [1, 16], strides = [1, 1]} : vector<1x64xf32> to vector<1x16xf32>
    %106 = math.tanh %105 : vector<1x16xf32>
    %107 = vector.extract_strided_slice %102 {offsets = [0, 48], sizes = [1, 16], strides = [1, 1]} : vector<1x64xf32> to vector<1x16xf32>
    %108 = arith.mulf %104, %92 : vector<1x16xf32>
    %109 = arith.mulf %103, %106 : vector<1x16xf32>
    %110 = arith.addf %108, %109 : vector<1x16xf32>
    %111 = math.tanh %110 : vector<1x16xf32>
    %112 = arith.mulf %107, %111 : vector<1x16xf32>
    %113 = vector.extract_strided_slice %55 {offsets = [3, 0], sizes = [1, 64], strides = [1, 1]} : vector<8x64xf32> to vector<1x64xf32>
    %cst_48 = arith.constant dense<0.000000e+00> : vector<1x64xf32>
    %114 = tpu.matmul %112, %56, %cst_48 {dimension_numbers = #tpu.dot_dimension_numbers<[1], [0], [0], [1], [0, 0, 1, 1], [], []>} : vector<1x16xf32>, vector<16x64xf32>, vector<1x64xf32> -> vector<1x64xf32>
    %115 = arith.addf %113, %114 : vector<1x64xf32>
    %116 = arith.negf %115 : vector<1x64xf32>
    %117 = math.exp %116 : vector<1x64xf32>
    %cst_49 = arith.constant 1.000000e+00 : f32
    %118 = vector.broadcast %cst_49 : f32 to vector<1x64xf32>
    %119 = arith.addf %118, %117 : vector<1x64xf32>
    %120 = arith.divf %118, %119 : vector<1x64xf32>
    %121 = vector.extract_strided_slice %120 {offsets = [0, 0], sizes = [1, 16], strides = [1, 1]} : vector<1x64xf32> to vector<1x16xf32>
    %122 = vector.extract_strided_slice %120 {offsets = [0, 16], sizes = [1, 16], strides = [1, 1]} : vector<1x64xf32> to vector<1x16xf32>
    %123 = vector.extract_strided_slice %115 {offsets = [0, 32], sizes = [1, 16], strides = [1, 1]} : vector<1x64xf32> to vector<1x16xf32>
    %124 = math.tanh %123 : vector<1x16xf32>
    %125 = vector.extract_strided_slice %120 {offsets = [0, 48], sizes = [1, 16], strides = [1, 1]} : vector<1x64xf32> to vector<1x16xf32>
    %126 = arith.mulf %122, %110 : vector<1x16xf32>
    %127 = arith.mulf %121, %124 : vector<1x16xf32>
    %128 = arith.addf %126, %127 : vector<1x16xf32>
    %129 = math.tanh %128 : vector<1x16xf32>
    %130 = arith.mulf %125, %129 : vector<1x16xf32>
    %131 = vector.extract_strided_slice %55 {offsets = [4, 0], sizes = [1, 64], strides = [1, 1]} : vector<8x64xf32> to vector<1x64xf32>
    %cst_50 = arith.constant dense<0.000000e+00> : vector<1x64xf32>
    %132 = tpu.matmul %130, %56, %cst_50 {dimension_numbers = #tpu.dot_dimension_numbers<[1], [0], [0], [1], [0, 0, 1, 1], [], []>} : vector<1x16xf32>, vector<16x64xf32>, vector<1x64xf32> -> vector<1x64xf32>
    %133 = arith.addf %131, %132 : vector<1x64xf32>
    %134 = arith.negf %133 : vector<1x64xf32>
    %135 = math.exp %134 : vector<1x64xf32>
    %cst_51 = arith.constant 1.000000e+00 : f32
    %136 = vector.broadcast %cst_51 : f32 to vector<1x64xf32>
    %137 = arith.addf %136, %135 : vector<1x64xf32>
    %138 = arith.divf %136, %137 : vector<1x64xf32>
    %139 = vector.extract_strided_slice %138 {offsets = [0, 0], sizes = [1, 16], strides = [1, 1]} : vector<1x64xf32> to vector<1x16xf32>
    %140 = vector.extract_strided_slice %138 {offsets = [0, 16], sizes = [1, 16], strides = [1, 1]} : vector<1x64xf32> to vector<1x16xf32>
    %141 = vector.extract_strided_slice %133 {offsets = [0, 32], sizes = [1, 16], strides = [1, 1]} : vector<1x64xf32> to vector<1x16xf32>
    %142 = math.tanh %141 : vector<1x16xf32>
    %143 = vector.extract_strided_slice %138 {offsets = [0, 48], sizes = [1, 16], strides = [1, 1]} : vector<1x64xf32> to vector<1x16xf32>
    %144 = arith.mulf %140, %128 : vector<1x16xf32>
    %145 = arith.mulf %139, %142 : vector<1x16xf32>
    %146 = arith.addf %144, %145 : vector<1x16xf32>
    %147 = math.tanh %146 : vector<1x16xf32>
    %148 = arith.mulf %143, %147 : vector<1x16xf32>
    %149 = vector.extract_strided_slice %55 {offsets = [5, 0], sizes = [1, 64], strides = [1, 1]} : vector<8x64xf32> to vector<1x64xf32>
    %cst_52 = arith.constant dense<0.000000e+00> : vector<1x64xf32>
    %150 = tpu.matmul %148, %56, %cst_52 {dimension_numbers = #tpu.dot_dimension_numbers<[1], [0], [0], [1], [0, 0, 1, 1], [], []>} : vector<1x16xf32>, vector<16x64xf32>, vector<1x64xf32> -> vector<1x64xf32>
    %151 = arith.addf %149, %150 : vector<1x64xf32>
    %152 = arith.negf %151 : vector<1x64xf32>
    %153 = math.exp %152 : vector<1x64xf32>
    %cst_53 = arith.constant 1.000000e+00 : f32
    %154 = vector.broadcast %cst_53 : f32 to vector<1x64xf32>
    %155 = arith.addf %154, %153 : vector<1x64xf32>
    %156 = arith.divf %154, %155 : vector<1x64xf32>
    %157 = vector.extract_strided_slice %156 {offsets = [0, 0], sizes = [1, 16], strides = [1, 1]} : vector<1x64xf32> to vector<1x16xf32>
    %158 = vector.extract_strided_slice %156 {offsets = [0, 16], sizes = [1, 16], strides = [1, 1]} : vector<1x64xf32> to vector<1x16xf32>
    %159 = vector.extract_strided_slice %151 {offsets = [0, 32], sizes = [1, 16], strides = [1, 1]} : vector<1x64xf32> to vector<1x16xf32>
    %160 = math.tanh %159 : vector<1x16xf32>
    %161 = vector.extract_strided_slice %156 {offsets = [0, 48], sizes = [1, 16], strides = [1, 1]} : vector<1x64xf32> to vector<1x16xf32>
    %162 = arith.mulf %158, %146 : vector<1x16xf32>
    %163 = arith.mulf %157, %160 : vector<1x16xf32>
    %164 = arith.addf %162, %163 : vector<1x16xf32>
    %165 = math.tanh %164 : vector<1x16xf32>
    %166 = arith.mulf %161, %165 : vector<1x16xf32>
    %167 = vector.extract_strided_slice %55 {offsets = [6, 0], sizes = [1, 64], strides = [1, 1]} : vector<8x64xf32> to vector<1x64xf32>
    %cst_54 = arith.constant dense<0.000000e+00> : vector<1x64xf32>
    %168 = tpu.matmul %166, %56, %cst_54 {dimension_numbers = #tpu.dot_dimension_numbers<[1], [0], [0], [1], [0, 0, 1, 1], [], []>} : vector<1x16xf32>, vector<16x64xf32>, vector<1x64xf32> -> vector<1x64xf32>
    %169 = arith.addf %167, %168 : vector<1x64xf32>
    %170 = arith.negf %169 : vector<1x64xf32>
    %171 = math.exp %170 : vector<1x64xf32>
    %cst_55 = arith.constant 1.000000e+00 : f32
    %172 = vector.broadcast %cst_55 : f32 to vector<1x64xf32>
    %173 = arith.addf %172, %171 : vector<1x64xf32>
    %174 = arith.divf %172, %173 : vector<1x64xf32>
    %175 = vector.extract_strided_slice %174 {offsets = [0, 0], sizes = [1, 16], strides = [1, 1]} : vector<1x64xf32> to vector<1x16xf32>
    %176 = vector.extract_strided_slice %174 {offsets = [0, 16], sizes = [1, 16], strides = [1, 1]} : vector<1x64xf32> to vector<1x16xf32>
    %177 = vector.extract_strided_slice %169 {offsets = [0, 32], sizes = [1, 16], strides = [1, 1]} : vector<1x64xf32> to vector<1x16xf32>
    %178 = math.tanh %177 : vector<1x16xf32>
    %179 = vector.extract_strided_slice %174 {offsets = [0, 48], sizes = [1, 16], strides = [1, 1]} : vector<1x64xf32> to vector<1x16xf32>
    %180 = arith.mulf %176, %164 : vector<1x16xf32>
    %181 = arith.mulf %175, %178 : vector<1x16xf32>
    %182 = arith.addf %180, %181 : vector<1x16xf32>
    %183 = math.tanh %182 : vector<1x16xf32>
    %184 = arith.mulf %179, %183 : vector<1x16xf32>
    %185 = vector.extract_strided_slice %55 {offsets = [7, 0], sizes = [1, 64], strides = [1, 1]} : vector<8x64xf32> to vector<1x64xf32>
    %cst_56 = arith.constant dense<0.000000e+00> : vector<1x64xf32>
    %186 = tpu.matmul %184, %56, %cst_56 {dimension_numbers = #tpu.dot_dimension_numbers<[1], [0], [0], [1], [0, 0, 1, 1], [], []>} : vector<1x16xf32>, vector<16x64xf32>, vector<1x64xf32> -> vector<1x64xf32>
    %187 = arith.addf %185, %186 : vector<1x64xf32>
    %188 = arith.negf %187 : vector<1x64xf32>
    %189 = math.exp %188 : vector<1x64xf32>
    %cst_57 = arith.constant 1.000000e+00 : f32
    %190 = vector.broadcast %cst_57 : f32 to vector<1x64xf32>
    %191 = arith.addf %190, %189 : vector<1x64xf32>
    %192 = arith.divf %190, %191 : vector<1x64xf32>
    %193 = vector.extract_strided_slice %192 {offsets = [0, 0], sizes = [1, 16], strides = [1, 1]} : vector<1x64xf32> to vector<1x16xf32>
    %194 = vector.extract_strided_slice %192 {offsets = [0, 16], sizes = [1, 16], strides = [1, 1]} : vector<1x64xf32> to vector<1x16xf32>
    %195 = vector.extract_strided_slice %187 {offsets = [0, 32], sizes = [1, 16], strides = [1, 1]} : vector<1x64xf32> to vector<1x16xf32>
    %196 = math.tanh %195 : vector<1x16xf32>
    %197 = vector.extract_strided_slice %192 {offsets = [0, 48], sizes = [1, 16], strides = [1, 1]} : vector<1x64xf32> to vector<1x16xf32>
    %198 = arith.mulf %194, %182 : vector<1x16xf32>
    %199 = arith.mulf %193, %196 : vector<1x16xf32>
    %200 = arith.addf %198, %199 : vector<1x16xf32>
    %201 = math.tanh %200 : vector<1x16xf32>
    %202 = arith.mulf %197, %201 : vector<1x16xf32>
    %c0_58 = arith.constant 0 : index
    %c0_59 = arith.constant 0 : index
    %c0_60 = arith.constant 0 : index
    %203 = vector.load %arg17[%c0_58, %c0_59, %c0_60] : memref<1x1x16xf32, #tpu.memory_space<vmem>>, vector<1x1x16xf32>
    %204 = vector.shape_cast %203 : vector<1x1x16xf32> to vector<1x16xf32>
    %205 = vector.shape_cast %202 : vector<1x16xf32> to vector<1x1x16xf32>
    tpu.vector_store %arg17[%c0_58, %c0_59, %c0_60], %205 {strides = array<i32>} : memref<1x1x16xf32, #tpu.memory_space<vmem>>, vector<1x1x16xf32>,
    return
  }
  func.func @transform_0(%arg0: i32) -> (i32, i32, i32) {
    %c0_i32 = arith.constant 0 : i32
    %c0_i32_0 = arith.constant 0 : i32
    %c0_i32_1 = arith.constant 0 : i32
    return %arg0, %c0_i32, %c0_i32_0 : i32, i32, i32
  }
  func.func @transform_1(%arg0: i32) -> (i32, i32) {
    %c0_i32 = arith.constant 0 : i32
    %c0_i32_0 = arith.constant 0 : i32
    %c0_i32_1 = arith.constant 0 : i32
    return %c0_i32, %c0_i32_0 : i32, i32
  }
  func.func @transform_2(%arg0: i32) -> (i32, i32) {
    %c0_i32 = arith.constant 0 : i32
    %c0_i32_0 = arith.constant 0 : i32
    %c0_i32_1 = arith.constant 0 : i32
    return %c0_i32, %c0_i32_0 : i32, i32
  }
  func.func @transform_3(%arg0: i32) -> (i32, i32) {
    %c0_i32 = arith.constant 0 : i32
    %c0_i32_0 = arith.constant 0 : i32
    %c0_i32_1 = arith.constant 0 : i32
    return %c0_i32, %c0_i32_0 : i32, i32
  }
  func.func @transform_4(%arg0: i32) -> (i32, i32) {
    %c0_i32 = arith.constant 0 : i32
    %c0_i32_0 = arith.constant 0 : i32
    %c0_i32_1 = arith.constant 0 : i32
    return %c0_i32, %c0_i32_0 : i32, i32
  }
  func.func @transform_5(%arg0: i32) -> (i32, i32) {
    %c0_i32 = arith.constant 0 : i32
    %c0_i32_0 = arith.constant 0 : i32
    %c0_i32_1 = arith.constant 0 : i32
    return %c0_i32, %c0_i32_0 : i32, i32
  }
  func.func @transform_6(%arg0: i32) -> (i32, i32) {
    %c0_i32 = arith.constant 0 : i32
    %c0_i32_0 = arith.constant 0 : i32
    %c0_i32_1 = arith.constant 0 : i32
    return %c0_i32, %c0_i32_0 : i32, i32
  }
  func.func @transform_7(%arg0: i32) -> (i32, i32) {
    %c0_i32 = arith.constant 0 : i32
    %c0_i32_0 = arith.constant 0 : i32
    %c0_i32_1 = arith.constant 0 : i32
    return %c0_i32, %c0_i32_0 : i32, i32
  }
  func.func @transform_8(%arg0: i32) -> (i32, i32) {
    %c0_i32 = arith.constant 0 : i32
    %c0_i32_0 = arith.constant 0 : i32
    %c0_i32_1 = arith.constant 0 : i32
    return %c0_i32, %c0_i32_0 : i32, i32
  }
  func.func @transform_9(%arg0: i32) -> (i32, i32) {
    %c0_i32 = arith.constant 0 : i32
    %c0_i32_0 = arith.constant 0 : i32
    %c0_i32_1 = arith.constant 0 : i32
    return %c0_i32, %c0_i32_0 : i32, i32
  }
  func.func @transform_10(%arg0: i32) -> (i32, i32) {
    %c0_i32 = arith.constant 0 : i32
    %c0_i32_0 = arith.constant 0 : i32
    %c0_i32_1 = arith.constant 0 : i32
    return %c0_i32, %c0_i32_0 : i32, i32
  }
  func.func @transform_11(%arg0: i32) -> (i32, i32) {
    %c0_i32 = arith.constant 0 : i32
    %c0_i32_0 = arith.constant 0 : i32
    %c0_i32_1 = arith.constant 0 : i32
    return %c0_i32, %c0_i32_0 : i32, i32
  }
  func.func @transform_12(%arg0: i32) -> (i32, i32) {
    %c0_i32 = arith.constant 0 : i32
    %c0_i32_0 = arith.constant 0 : i32
    %c0_i32_1 = arith.constant 0 : i32
    return %c0_i32, %c0_i32_0 : i32, i32
  }
  func.func @transform_13(%arg0: i32) -> (i32, i32) {
    %c0_i32 = arith.constant 0 : i32
    %c0_i32_0 = arith.constant 0 : i32
    %c0_i32_1 = arith.constant 0 : i32
    return %c0_i32, %c0_i32_0 : i32, i32
  }
  func.func @transform_14(%arg0: i32) -> (i32, i32) {
    %c0_i32 = arith.constant 0 : i32
    %c0_i32_0 = arith.constant 0 : i32
    %c0_i32_1 = arith.constant 0 : i32
    return %c0_i32, %c0_i32_0 : i32, i32
  }
  func.func @transform_15(%arg0: i32) -> (i32, i32) {
    %c0_i32 = arith.constant 0 : i32
    %c0_i32_0 = arith.constant 0 : i32
    %c0_i32_1 = arith.constant 0 : i32
    return %c0_i32, %c0_i32_0 : i32, i32
  }
  func.func @transform_16(%arg0: i32) -> (i32, i32, i32) {
    %c0_i32 = arith.constant 0 : i32
    %c0_i32_0 = arith.constant 0 : i32
    %c0_i32_1 = arith.constant 0 : i32
    return %arg0, %c0_i32, %c0_i32_0 : i32, i32, i32
  }
}

</mosaic_0001>

<llo_original>
// kernel: erp_encoder_forward.1
$region0: #{erp_encoder_forward.1}
  #allocation0 [shape = 'u32[]', space=smem, size = 0x4, offset = 0x4, fixed_abs, tag = 'smem constant byte address 0x4 - core index']
  #allocation1 [shape = 'u32[72,128]{1,0:T(1,128)}', space=vmem, size = 0x9000, scoped, tag = 'internal scratch']
  %s0 = inlined_call_operand.vmem [shape: f32[2,8,16], index: 0, kind: input, shape index: {}]
  %s1 = inlined_call_operand.vmem [shape: bf16[16,128], index: 1, kind: input, shape index: {}]
  %s2 = inlined_call_operand.hbm [shape: f32[1,128], index: 2, kind: input, shape index: {}]
  %s3 = inlined_call_operand.hbm [shape: f32[1,128], index: 3, kind: input, shape index: {}]
  %s4 = inlined_call_operand.vmem [shape: bf16[128,64], index: 4, kind: input, shape index: {}]
  %s5 = inlined_call_operand.hbm [shape: f32[1,64], index: 5, kind: input, shape index: {}]
  %s6 = inlined_call_operand.hbm [shape: f32[1,64], index: 6, kind: input, shape index: {}]
  %s7 = inlined_call_operand.hbm [shape: bf16[64,256], index: 7, kind: input, shape index: {}]
  %s8 = inlined_call_operand.hbm [shape: f32[1,256], index: 8, kind: input, shape index: {}]
  %s9 = inlined_call_operand.hbm [shape: f32[1,256], index: 9, kind: input, shape index: {}]
  %s10 = inlined_call_operand.vmem [shape: bf16[256,128], index: 10, kind: input, shape index: {}]
  %s11 = inlined_call_operand.hbm [shape: f32[1,128], index: 11, kind: input, shape index: {}]
  %s12 = inlined_call_operand.hbm [shape: f32[1,128], index: 12, kind: input, shape index: {}]
  %s13 = inlined_call_operand.vmem [shape: bf16[128,64], index: 13, kind: input, shape index: {}]
  %s14 = inlined_call_operand.vmem [shape: f32[16,64], index: 14, kind: input, shape index: {}]
  %s15 = inlined_call_operand.hbm [shape: f32[1,64], index: 15, kind: input, shape index: {}]
  %s16 = inlined_call_operand.hbm [shape: f32[2,1,16], index: 16, kind: output, shape index: {}]
  %s17 = sld [smem:[#allocation0]]
  $region137: #{erp_encoder_forward.1} parent=0
    _
  %s19 = ssub.s32 1, %s17
  %s20 = scalar_select 0, %s19, %s17
  $region1: #{erp_encoder_forward.1} parent=0
    #allocation2 [shape = 'u8[512]{0}', space=vmem, size = 0x400, scoped, tag = 'input window, operand 2, single buffered']
    #allocation3 [shape = 's32[2]{0}', space=sflag, size = 0x8, scoped, tag = 'scoped memory for erp_encoder_forward.1']
    #allocation4 [shape = 's32[2]{0}', space=sflag, size = 0x8, scoped, tag = 'scoped memory for erp_encoder_forward.1']
    #allocation5 [shape = 'u8[512]{0}', space=vmem, size = 0x400, scoped, tag = 'input window, operand 3, single buffered']
    #allocation6 [shape = 's32[1]{0}', space=sflag, size = 0x4, scoped, tag = 'scoped memory for erp_encoder_forward.1']
    #allocation7 [shape = 'u8[512]{0}', space=vmem, size = 0x400, scoped, tag = 'input window, operand 5, single buffered']
    #allocation8 [shape = 'u8[512]{0}', space=vmem, size = 0x400, scoped, tag = 'input window, operand 6, single buffered']
    #allocation9 [shape = 's32[1]{0}', space=sflag, size = 0x4, scoped, tag = 'scoped memory for erp_encoder_forward.1']
    #allocation10 [shape = 'u8[32768]{0}', space=vmem, size = 0x8000, scoped, tag = 'input window, operand 7, single buffered']
    #allocation11 [shape = 'u8[1024]{0}', space=vmem, size = 0x400, scoped, tag = 'input window, operand 8, single buffered']
    #allocation12 [shape = 's32[1]{0}', space=sflag, size = 0x4, scoped, tag = 'scoped memory for erp_encoder_forward.1']
    #allocation13 [shape = 'u8[1024]{0}', space=vmem, size = 0x400, scoped, tag = 'input window, operand 9, single buffered']
    #allocation14 [shape = 'u8[512]{0}', space=vmem, size = 0x400, scoped, tag = 'input window, operand 11, single buffered']
    #allocation15 [shape = 's32[1]{0}', space=sflag, size = 0x4, scoped, tag = 'scoped memory for erp_encoder_forward.1']
    #allocation16 [shape = 'u8[512]{0}', space=vmem, size = 0x400, scoped, tag = 'input window, operand 12, single buffered']
    #allocation17 [shape = 'u8[512]{0}', space=vmem, size = 0x400, scoped, tag = 'input window, operand 15, single buffered']
    #allocation18 [shape = 's32[1]{0}', space=sflag, size = 0x4, scoped, tag = 'scoped memory for erp_encoder_forward.1']
    #allocation19 [shape = 'u8[1024]{0}', space=vmem, size = 0x400, scoped, tag = 'output window, operand 0']
    %21 = vsyncpa [#allocation3], 0
    %22 = vsyncpa [#allocation6], 0
    %23 = vsyncpa [#allocation9], 0
    %24 = vsyncpa [#allocation12], 0
    %25 = vsyncpa [#allocation15], 0
    %26 = vsyncpa [#allocation18], 0
    %27 = vsyncpa [#allocation4], 0
    %s28 = scalar_lea.sflag [#allocation4], 1
    %29 = vsyncpa %s28, 0
    loop: start=0, step=1, limit=4
    $region2: #{erp_encoder_forward.1} parent=1 // loop_pre_header
      _
    $region3: #{erp_encoder_forward.1} parent=1 // loop_header
      %s31 = sphi 0, %s35
      %p32 = scmp.ge.s32.totalorder %s31, 4
      %s41 = sphi 0, %s43
      %s44 = sphi 0, %s41
      %s45 = sphi 0, %s44
      %s61 = sphi 0, %s45
      %s65 = sphi 0, %s65
      %s67 = sphi 0, %s65
      %s68 = sphi 0, %s67
      %s82 = sphi 0, %s68
      %s86 = sphi 0, %s86
      %s88 = sphi 0, %s86
      %s89 = sphi 0, %s88
      %s103 = sphi 0, %s89
      %s107 = sphi 0, %s107
      %s109 = sphi 0, %s107
      %s110 = sphi 0, %s109
      %s124 = sphi 0, %s110
      %s128 = sphi 0, %s128
      %s130 = sphi 0, %s128
      %s131 = sphi 0, %s130
      %s145 = sphi 0, %s131
      %s149 = sphi 0, %s149
      %s151 = sphi 0, %s149
      %s152 = sphi 0, %s151
      %s166 = sphi 0, %s152
      %s170 = sphi 0, %s170
      %s172 = sphi 0, %s170
      %s173 = sphi 0, %s172
      %s187 = sphi 0, %s173
      %s191 = sphi 0, %s191
      %s193 = sphi 0, %s191
      %s194 = sphi 0, %s193
      %s208 = sphi 0, %s194
      %s212 = sphi 0, %s212
      %s214 = sphi 0, %s212
      %s215 = sphi 0, %s214
      %s229 = sphi 0, %s215
      %s233 = sphi 0, %s233
      %s235 = sphi 0, %s233
      %s236 = sphi 0, %s235
      %s250 = sphi 0, %s236
      %s254 = sphi 0, %s254
      %s256 = sphi 0, %s254
      %s257 = sphi 0, %s256
      %s271 = sphi 0, %s257
      %s275 = sphi 0, %s275
      %s277 = sphi 0, %s275
      %s278 = sphi 0, %s277
      %s292 = sphi 0, %s278
      %s296 = sphi 0, %s296
      %s298 = sphi 0, %s296
      %s299 = sphi 0, %s298
      %s313 = sphi 0, %s299
      %s317 = sphi 0, %s317
      %s319 = sphi 0, %s317
      %s320 = sphi 0, %s319
      %s334 = sphi 0, %s320
      %s338 = sphi 0, %s338
      %s340 = sphi 0, %s338
      %s341 = sphi 0, %s340
      %s355 = sphi 0, %s341
      %s359 = sphi 0, %s359
      %s361 = sphi 0, %s359
      %s362 = sphi 0, %s361
      %s376 = sphi 0, %s362
      %s382 = sphi 0, %s384
      %s385 = sphi 0, %s382
      %s386 = sphi 0, %s385
      %s402 = sphi 0, %s386
    $region4: #{erp_encoder_forward.1} parent=1 // loop_header_branch
      %34 = sbr.rel (%p32) target = $region8
    $region5: #{erp_encoder_forward.1} parent=1 // loop_body
      %s36 = ssub.s32 %s31, 1
      %s37 = ssub.s32 %s31, 2
      %s38 = sadd.s32 %s31, 1
      %s39 = ssub.s32 %s31, %s38
      %p40 = scmp.eq.s32.totalorder %s39, 0
      %s42 = sadd.s32 %s41, 1
      %s43 = scalar_select %p40, %s41, %s42
      %p46 = pneg %p40
      %p47 = scmp.eq.s32.totalorder %s31, 1
      %p48 = por %p46, %p47
      %p49 = scmp.ne.s32.totalorder %s41, %s44
      %p50 = scmp.eq.s32.totalorder %s31, 0
      %p51 = por %p49, %p50
      %p52 = scmp.ne.s32.totalorder %s41, %s44
      %p53 = scmp.eq.s32.totalorder %s36, 1
      %p54 = por %p52, %p53
      %p55 = scmp.ne.s32.totalorder %s44, %s45
      %p56 = scmp.eq.s32.totalorder %s36, 0
      %p57 = por %p55, %p56
      %p58 = scmp.ne.s32.totalorder %s44, %s45
      %p59 = scmp.eq.s32.totalorder %s37, 1
      %p60 = por %p58, %p59
      %p62 = scmp.ne.s32.totalorder %s45, %s61
      %p63 = scmp.eq.s32.totalorder %s37, 0
      %p64 = por %p62, %p63
      %s66 = sadd.s32 %s65, 1
      %p69 = scmp.eq.s32.totalorder %s31, 1
      %p70 = scmp.ne.s32.totalorder %s65, %s67
      %p71 = scmp.eq.s32.totalorder %s31, 0
      %p72 = por %p70, %p71
      %p73 = scmp.ne.s32.totalorder %s65, %s67
      %p74 = scmp.eq.s32.totalorder %s36, 1
      %p75 = por %p73, %p74
      %p76 = scmp.ne.s32.totalorder %s67, %s68
      %p77 = scmp.eq.s32.totalorder %s36, 0
      %p78 = por %p76, %p77
      %p79 = scmp.ne.s32.totalorder %s67, %s68
      %p80 = scmp.eq.s32.totalorder %s37, 1
      %p81 = por %p79, %p80
      %p83 = scmp.ne.s32.totalorder %s68, %s82
      %p84 = scmp.eq.s32.totalorder %s37, 0
      %p85 = por %p83, %p84
      %s87 = sadd.s32 %s86, 1
      %p90 = scmp.eq.s32.totalorder %s31, 1
      %p91 = scmp.ne.s32.totalorder %s86, %s88
      %p92 = scmp.eq.s32.totalorder %s31, 0
      %p93 = por %p91, %p92
      %p94 = scmp.ne.s32.totalorder %s86, %s88
      %p95 = scmp.eq.s32.totalorder %s36, 1
      %p96 = por %p94, %p95
      %p97 = scmp.ne.s32.totalorder %s88, %s89
      %p98 = scmp.eq.s32.totalorder %s36, 0
      %p99 = por %p97, %p98
      %p100 = scmp.ne.s32.totalorder %s88, %s89
      %p101 = scmp.eq.s32.totalorder %s37, 1
      %p102 = por %p100, %p101
      %p104 = scmp.ne.s32.totalorder %s89, %s103
      %p105 = scmp.eq.s32.totalorder %s37, 0
      %p106 = por %p104, %p105
      %s108 = sadd.s32 %s107, 1
      %p111 = scmp.eq.s32.totalorder %s31, 1
      %p112 = scmp.ne.s32.totalorder %s107, %s109
      %p113 = scmp.eq.s32.totalorder %s31, 0
      %p114 = por %p112, %p113
      %p115 = scmp.ne.s32.totalorder %s107, %s109
      %p116 = scmp.eq.s32.totalorder %s36, 1
      %p117 = por %p115, %p116
      %p118 = scmp.ne.s32.totalorder %s109, %s110
      %p119 = scmp.eq.s32.totalorder %s36, 0
      %p120 = por %p118, %p119
      %p121 = scmp.ne.s32.totalorder %s109, %s110
      %p122 = scmp.eq.s32.totalorder %s37, 1
      %p123 = por %p121, %p122
      %p125 = scmp.ne.s32.totalorder %s110, %s124
      %p126 = scmp.eq.s32.totalorder %s37, 0
      %p127 = por %p125, %p126
      %s129 = sadd.s32 %s128, 1
      %p132 = scmp.eq.s32.totalorder %s31, 1
      %p133 = scmp.ne.s32.totalorder %s128, %s130
      %p134 = scmp.eq.s32.totalorder %s31, 0
      %p135 = por %p133, %p134
      %p136 = scmp.ne.s32.totalorder %s128, %s130
      %p137 = scmp.eq.s32.totalorder %s36, 1
      %p138 = por %p136, %p137
      %p139 = scmp.ne.s32.totalorder %s130, %s131
      %p140 = scmp.eq.s32.totalorder %s36, 0
      %p141 = por %p139, %p140
      %p142 = scmp.ne.s32.totalorder %s130, %s131
      %p143 = scmp.eq.s32.totalorder %s37, 1
      %p144 = por %p142, %p143
      %p146 = scmp.ne.s32.totalorder %s131, %s145
      %p147 = scmp.eq.s32.totalorder %s37, 0
      %p148 = por %p146, %p147
      %s150 = sadd.s32 %s149, 1
      %p153 = scmp.eq.s32.totalorder %s31, 1
      %p154 = scmp.ne.s32.totalorder %s149, %s151
      %p155 = scmp.eq.s32.totalorder %s31, 0
      %p156 = por %p154, %p155
      %p157 = scmp.ne.s32.totalorder %s149, %s151
      %p158 = scmp.eq.s32.totalorder %s36, 1
      %p159 = por %p157, %p158
      %p160 = scmp.ne.s32.totalorder %s151, %s152
      %p161 = scmp.eq.s32.totalorder %s36, 0
      %p162 = por %p160, %p161
      %p163 = scmp.ne.s32.totalorder %s151, %s152
      %p164 = scmp.eq.s32.totalorder %s37, 1
      %p165 = por %p163, %p164
      %p167 = scmp.ne.s32.totalorder %s152, %s166
      %p168 = scmp.eq.s32.totalorder %s37, 0
      %p169 = por %p167, %p168
      %s171 = sadd.s32 %s170, 1
      %p174 = scmp.eq.s32.totalorder %s31, 1
      %p175 = scmp.ne.s32.totalorder %s170, %s172
      %p176 = scmp.eq.s32.totalorder %s31, 0
      %p177 = por %p175, %p176
      %p178 = scmp.ne.s32.totalorder %s170, %s172
      %p179 = scmp.eq.s32.totalorder %s36, 1
      %p180 = por %p178, %p179
      %p181 = scmp.ne.s32.totalorder %s172, %s173
      %p182 = scmp.eq.s32.totalorder %s36, 0
      %p183 = por %p181, %p182
      %p184 = scmp.ne.s32.totalorder %s172, %s173
      %p185 = scmp.eq.s32.totalorder %s37, 1
      %p186 = por %p184, %p185
      %p188 = scmp.ne.s32.totalorder %s173, %s187
      %p189 = scmp.eq.s32.totalorder %s37, 0
      %p190 = por %p188, %p189
      %s192 = sadd.s32 %s191, 1
      %p195 = scmp.eq.s32.totalorder %s31, 1
      %p196 = scmp.ne.s32.totalorder %s191, %s193
      %p197 = scmp.eq.s32.totalorder %s31, 0
      %p198 = por %p196, %p197
      %p199 = scmp.ne.s32.totalorder %s191, %s193
      %p200 = scmp.eq.s32.totalorder %s36, 1
      %p201 = por %p199, %p200
      %p202 = scmp.ne.s32.totalorder %s193, %s194
      %p203 = scmp.eq.s32.totalorder %s36, 0
      %p204 = por %p202, %p203
      %p205 = scmp.ne.s32.totalorder %s193, %s194
      %p206 = scmp.eq.s32.totalorder %s37, 1
      %p207 = por %p205, %p206
      %p209 = scmp.ne.s32.totalorder %s194, %s208
      %p210 = scmp.eq.s32.totalorder %s37, 0
      %p211 = por %p209, %p210
      %s213 = sadd.s32 %s212, 1
      %p216 = scmp.eq.s32.totalorder %s31, 1
      %p217 = scmp.ne.s32.totalorder %s212, %s214
      %p218 = scmp.eq.s32.totalorder %s31, 0
      %p219 = por %p217, %p218
      %p220 = scmp.ne.s32.totalorder %s212, %s214
      %p221 = scmp.eq.s32.totalorder %s36, 1
      %p222 = por %p220, %p221
      %p223 = scmp.ne.s32.totalorder %s214, %s215
      %p224 = scmp.eq.s32.totalorder %s36, 0
      %p225 = por %p223, %p224
      %p226 = scmp.ne.s32.totalorder %s214, %s215
      %p227 = scmp.eq.s32.totalorder %s37, 1
      %p228 = por %p226, %p227
      %p230 = scmp.ne.s32.totalorder %s215, %s229
      %p231 = scmp.eq.s32.totalorder %s37, 0
      %p232 = por %p230, %p231
      %s234 = sadd.s32 %s233, 1
      %p237 = scmp.eq.s32.totalorder %s31, 1
      %p238 = scmp.ne.s32.totalorder %s233, %s235
      %p239 = scmp.eq.s32.totalorder %s31, 0
      %p240 = por %p238, %p239
      %p241 = scmp.ne.s32.totalorder %s233, %s235
      %p242 = scmp.eq.s32.totalorder %s36, 1
      %p243 = por %p241, %p242
      %p244 = scmp.ne.s32.totalorder %s235, %s236
      %p245 = scmp.eq.s32.totalorder %s36, 0
      %p246 = por %p244, %p245
      %p247 = scmp.ne.s32.totalorder %s235, %s236
      %p248 = scmp.eq.s32.totalorder %s37, 1
      %p249 = por %p247, %p248
      %p251 = scmp.ne.s32.totalorder %s236, %s250
      %p252 = scmp.eq.s32.totalorder %s37, 0
      %p253 = por %p251, %p252
      %s255 = sadd.s32 %s254, 1
      %p258 = scmp.eq.s32.totalorder %s31, 1
      %p259 = scmp.ne.s32.totalorder %s254, %s256
      %p260 = scmp.eq.s32.totalorder %s31, 0
      %p261 = por %p259, %p260
      %p262 = scmp.ne.s32.totalorder %s254, %s256
      %p263 = scmp.eq.s32.totalorder %s36, 1
      %p264 = por %p262, %p263
      %p265 = scmp.ne.s32.totalorder %s256, %s257
      %p266 = scmp.eq.s32.totalorder %s36, 0
      %p267 = por %p265, %p266
      %p268 = scmp.ne.s32.totalorder %s256, %s257
      %p269 = scmp.eq.s32.totalorder %s37, 1
      %p270 = por %p268, %p269
      %p272 = scmp.ne.s32.totalorder %s257, %s271
      %p273 = scmp.eq.s32.totalorder %s37, 0
      %p274 = por %p272, %p273
      %s276 = sadd.s32 %s275, 1
      %p279 = scmp.eq.s32.totalorder %s31, 1
      %p280 = scmp.ne.s32.totalorder %s275, %s277
      %p281 = scmp.eq.s32.totalorder %s31, 0
      %p282 = por %p280, %p281
      %p283 = scmp.ne.s32.totalorder %s275, %s277
      %p284 = scmp.eq.s32.totalorder %s36, 1
      %p285 = por %p283, %p284
      %p286 = scmp.ne.s32.totalorder %s277, %s278
      %p287 = scmp.eq.s32.totalorder %s36, 0
      %p288 = por %p286, %p287
      %p289 = scmp.ne.s32.totalorder %s277, %s278
      %p290 = scmp.eq.s32.totalorder %s37, 1
      %p291 = por %p289, %p290
      %p293 = scmp.ne.s32.totalorder %s278, %s292
      %p294 = scmp.eq.s32.totalorder %s37, 0
      %p295 = por %p293, %p294
      %s297 = sadd.s32 %s296, 1
      %p300 = scmp.eq.s32.totalorder %s31, 1
      %p301 = scmp.ne.s32.totalorder %s296, %s298
      %p302 = scmp.eq.s32.totalorder %s31, 0
      %p303 = por %p301, %p302
      %p304 = scmp.ne.s32.totalorder %s296, %s298
      %p305 = scmp.eq.s32.totalorder %s36, 1
      %p306 = por %p304, %p305
      %p307 = scmp.ne.s32.totalorder %s298, %s299
      %p308 = scmp.eq.s32.totalorder %s36, 0
      %p309 = por %p307, %p308
      %p310 = scmp.ne.s32.totalorder %s298, %s299
      %p311 = scmp.eq.s32.totalorder %s37, 1
      %p312 = por %p310, %p311
      %p314 = scmp.ne.s32.totalorder %s299, %s313
      %p315 = scmp.eq.s32.totalorder %s37, 0
      %p316 = por %p314, %p315
      %s318 = sadd.s32 %s317, 1
      %p321 = scmp.eq.s32.totalorder %s31, 1
      %p322 = scmp.ne.s32.totalorder %s317, %s319
      %p323 = scmp.eq.s32.totalorder %s31, 0
      %p324 = por %p322, %p323
      %p325 = scmp.ne.s32.totalorder %s317, %s319
      %p326 = scmp.eq.s32.totalorder %s36, 1
      %p327 = por %p325, %p326
      %p328 = scmp.ne.s32.totalorder %s319, %s320
      %p329 = scmp.eq.s32.totalorder %s36, 0
      %p330 = por %p328, %p329
      %p331 = scmp.ne.s32.totalorder %s319, %s320
      %p332 = scmp.eq.s32.totalorder %s37, 1
      %p333 = por %p331, %p332
      %p335 = scmp.ne.s32.totalorder %s320, %s334
      %p336 = scmp.eq.s32.totalorder %s37, 0
      %p337 = por %p335, %p336
      %s339 = sadd.s32 %s338, 1
      %p342 = scmp.eq.s32.totalorder %s31, 1
      %p343 = scmp.ne.s32.totalorder %s338, %s340
      %p344 = scmp.eq.s32.totalorder %s31, 0
      %p345 = por %p343, %p344
      %p346 = scmp.ne.s32.totalorder %s338, %s340
      %p347 = scmp.eq.s32.totalorder %s36, 1
      %p348 = por %p346, %p347
      %p349 = scmp.ne.s32.totalorder %s340, %s341
      %p350 = scmp.eq.s32.totalorder %s36, 0
      %p351 = por %p349, %p350
      %p352 = scmp.ne.s32.totalorder %s340, %s341
      %p353 = scmp.eq.s32.totalorder %s37, 1
      %p354 = por %p352, %p353
      %p356 = scmp.ne.s32.totalorder %s341, %s355
      %p357 = scmp.eq.s32.totalorder %s37, 0
      %p358 = por %p356, %p357
      %s360 = sadd.s32 %s359, 1
      %p363 = scmp.eq.s32.totalorder %s31, 1
      %p364 = scmp.ne.s32.totalorder %s359, %s361
      %p365 = scmp.eq.s32.totalorder %s31, 0
      %p366 = por %p364, %p365
      %p367 = scmp.ne.s32.totalorder %s359, %s361
      %p368 = scmp.eq.s32.totalorder %s36, 1
      %p369 = por %p367, %p368
      %p370 = scmp.ne.s32.totalorder %s361, %s362
      %p371 = scmp.eq.s32.totalorder %s36, 0
      %p372 = por %p370, %p371
      %p373 = scmp.ne.s32.totalorder %s361, %s362
      %p374 = scmp.eq.s32.totalorder %s37, 1
      %p375 = por %p373, %p374
      %p377 = scmp.ne.s32.totalorder %s362, %s376
      %p378 = scmp.eq.s32.totalorder %s37, 0
      %p379 = por %p377, %p378
      %s380 = ssub.s32 %s31, %s38
      %p381 = scmp.eq.s32.totalorder %s380, 0
      %s383 = sadd.s32 %s382, 1
      %s384 = scalar_select %p381, %s382, %s383
      %p387 = pneg %p381
      %p388 = scmp.eq.s32.totalorder %s31, 1
      %p389 = por %p387, %p388
      %p390 = scmp.ne.s32.totalorder %s382, %s385
      %p391 = scmp.eq.s32.totalorder %s31, 0
      %p392 = por %p390, %p391
      %p393 = scmp.ne.s32.totalorder %s382, %s385
      %p394 = scmp.eq.s32.totalorder %s36, 1
      %p395 = por %p393, %p394
      %p396 = scmp.ne.s32.totalorder %s385, %s386
      %p397 = scmp.eq.s32.totalorder %s36, 0
      %p398 = por %p396, %p397
      %p399 = scmp.ne.s32.totalorder %s385, %s386
      %p400 = scmp.eq.s32.totalorder %s37, 1
      %p401 = por %p399, %p400
      %p403 = scmp.ne.s32.totalorder %s386, %s402
      %p404 = scmp.eq.s32.totalorder %s37, 0
      %p405 = por %p403, %p404
      %p406 = scmp.le.s32.totalorder 1, %s31
      %p407 = scmp.lt.s32.totalorder %s31, 3
      %p408 = pnand %p406, %p407
      %p409 = pneg %p408
      // Predicated region
      $region9: #{erp_encoder_forward.1} parent=5 // pred_check
        _
      $region10: #{erp_encoder_forward.1} parent=5 // pred_check_branch
        %411 = sbr.rel (%p408) target = $region12
      $region11: #{erp_encoder_forward.1} parent=5 // pred_region
        %s412 = ssub.s32 %s31, 1
        // Predicated region
        $region13: #{erp_encoder_forward.1} parent=11 // pred_check
          %p413 = pneg %p78
        $region14: #{erp_encoder_forward.1} parent=11 // pred_check_branch
          %415 = sbr.rel (%p413) target = $region16
        $region15: #{erp_encoder_forward.1} parent=11 // pred_region
          _
        $region16: #{erp_encoder_forward.1} parent=11 // pred_fallthru
          _
        // Predicated region
        $region17: #{erp_encoder_forward.1} parent=11 // pred_check
          %p416 = pneg %p99
        $region18: #{erp_encoder_forward.1} parent=11 // pred_check_branch
          %418 = sbr.rel (%p416) target = $region20
        $region19: #{erp_encoder_forward.1} parent=11 // pred_region
          %420 = vsyncadd [#allocation3], 0
          %s422 = sshll.u32 %s2, 4
          %s423 = int_to_ptr.hbm [resolvable:$true] %s422
          %s424 = sshll.u32 [#allocation2], 4
          %s425 = int_to_ptr.vmem [resolvable:$true] %s424
          %427 = dma.hbm_to_vmem [thread:$0]  %s423, 16, %s425, [#allocation3]
        $region20: #{erp_encoder_forward.1} parent=11 // pred_fallthru
          _
        // Predicated region
        $region21: #{erp_encoder_forward.1} parent=11 // pred_check
          %p428 = pneg %p120
        $region22: #{erp_encoder_forward.1} parent=11 // pred_check_branch
          %430 = sbr.rel (%p428) target = $region24
        $region23: #{erp_encoder_forward.1} parent=11 // pred_region
          %432 = vsyncadd [#allocation6], 0
          %s434 = sshll.u32 %s3, 4
          %s435 = int_to_ptr.hbm [resolvable:$true] %s434
          %s436 = sshll.u32 [#allocation5], 4
          %s437 = int_to_ptr.vmem [resolvable:$true] %s436
          %439 = dma.hbm_to_vmem [thread:$0]  %s435, 16, %s437, [#allocation6]
        $region24: #{erp_encoder_forward.1} parent=11 // pred_fallthru
          _
        // Predicated region
        $region25: #{erp_encoder_forward.1} parent=11 // pred_check
          %p440 = pneg %p141
        $region26: #{erp_encoder_forward.1} parent=11 // pred_check_branch
          %442 = sbr.rel (%p440) target = $region28
        $region27: #{erp_encoder_forward.1} parent=11 // pred_region
          _
        $region28: #{erp_encoder_forward.1} parent=11 // pred_fallthru
          _
        // Predicated region
        $region29: #{erp_encoder_forward.1} parent=11 // pred_check
          %p443 = pneg %p162
        $region30: #{erp_encoder_forward.1} parent=11 // pred_check_branch
          %445 = sbr.rel (%p443) target = $region32
        $region31: #{erp_encoder_forward.1} parent=11 // pred_region
          %447 = vsyncadd [#allocation6], 0
          %s449 = sshll.u32 %s5, 4
          %s450 = int_to_ptr.hbm [resolvable:$true] %s449
          %s451 = sshll.u32 [#allocation7], 4
          %s452 = int_to_ptr.vmem [resolvable:$true] %s451
          %454 = dma.hbm_to_vmem [thread:$0]  %s450, 16, %s452, [#allocation6]
        $region32: #{erp_encoder_forward.1} parent=11 // pred_fallthru
          _
        // Predicated region
        $region33: #{erp_encoder_forward.1} parent=11 // pred_check
          %p455 = pneg %p183
        $region34: #{erp_encoder_forward.1} parent=11 // pred_check_branch
          %457 = sbr.rel (%p455) target = $region36
        $region35: #{erp_encoder_forward.1} parent=11 // pred_region
          %459 = vsyncadd [#allocation9], 0
          %s461 = sshll.u32 %s6, 4
          %s462 = int_to_ptr.hbm [resolvable:$true] %s461
          %s463 = sshll.u32 [#allocation8], 4
          %s464 = int_to_ptr.vmem [resolvable:$true] %s463
          %466 = dma.hbm_to_vmem [thread:$0]  %s462, 16, %s464, [#allocation9]
        $region36: #{erp_encoder_forward.1} parent=11 // pred_fallthru
          _
        // Predicated region
        $region37: #{erp_encoder_forward.1} parent=11 // pred_check
          %p467 = pneg %p204
        $region38: #{erp_encoder_forward.1} parent=11 // pred_check_branch
          %469 = sbr.rel (%p467) target = $region40
        $region39: #{erp_encoder_forward.1} parent=11 // pred_region
          %471 = vsyncadd [#allocation9], 0
          %s472 = sshll.u32 %s7, 4
          %s473 = int_to_ptr.hbm [resolvable:$true] %s472
          %s474 = sshll.u32 [#allocation10], 4
          %s475 = int_to_ptr.vmem [resolvable:$true] %s474
          %480 = dma.hbm_to_vmem [thread:$0]  %s473, 1024, %s475, [#allocation9], 128, 128, 8
        $region40: #{erp_encoder_forward.1} parent=11 // pred_fallthru
          _
        // Predicated region
        $region41: #{erp_encoder_forward.1} parent=11 // pred_check
          %p481 = pneg %p225
        $region42: #{erp_encoder_forward.1} parent=11 // pred_check_branch
          %483 = sbr.rel (%p481) target = $region44
        $region43: #{erp_encoder_forward.1} parent=11 // pred_region
          %485 = vsyncadd [#allocation12], 0
          %s487 = sshll.u32 %s8, 4
          %s488 = int_to_ptr.hbm [resolvable:$true] %s487
          %s489 = sshll.u32 [#allocation11], 4
          %s490 = int_to_ptr.vmem [resolvable:$true] %s489
          %492 = dma.hbm_to_vmem [thread:$0]  %s488, 32, %s490, [#allocation12]
        $region44: #{erp_encoder_forward.1} parent=11 // pred_fallthru
          _
        // Predicated region
        $region45: #{erp_encoder_forward.1} parent=11 // pred_check
          %p493 = pneg %p246
        $region46: #{erp_encoder_forward.1} parent=11 // pred_check_branch
          %495 = sbr.rel (%p493) target = $region48
        $region47: #{erp_encoder_forward.1} parent=11 // pred_region
          %497 = vsyncadd [#allocation12], 0
          %s499 = sshll.u32 %s9, 4
          %s500 = int_to_ptr.hbm [resolvable:$true] %s499
          %s501 = sshll.u32 [#allocation13], 4
          %s502 = int_to_ptr.vmem [resolvable:$true] %s501
          %504 = dma.hbm_to_vmem [thread:$0]  %s500, 32, %s502, [#allocation12]
        $region48: #{erp_encoder_forward.1} parent=11 // pred_fallthru
          _
        // Predicated region
        $region49: #{erp_encoder_forward.1} parent=11 // pred_check
          %p505 = pneg %p267
        $region50: #{erp_encoder_forward.1} parent=11 // pred_check_branch
          %507 = sbr.rel (%p505) target = $region52
        $region51: #{erp_encoder_forward.1} parent=11 // pred_region
          _
        $region52: #{erp_encoder_forward.1} parent=11 // pred_fallthru
          _
        // Predicated region
        $region53: #{erp_encoder_forward.1} parent=11 // pred_check
          %p508 = pneg %p288
        $region54: #{erp_encoder_forward.1} parent=11 // pred_check_branch
          %510 = sbr.rel (%p508) target = $region56
        $region55: #{erp_encoder_forward.1} parent=11 // pred_region
          %512 = vsyncadd [#allocation15], 0
          %s514 = sshll.u32 %s11, 4
          %s515 = int_to_ptr.hbm [resolvable:$true] %s514
          %s516 = sshll.u32 [#allocation14], 4
          %s517 = int_to_ptr.vmem [resolvable:$true] %s516
          %519 = dma.hbm_to_vmem [thread:$0]  %s515, 16, %s517, [#allocation15]
        $region56: #{erp_encoder_forward.1} parent=11 // pred_fallthru
          _
        // Predicated region
        $region57: #{erp_encoder_forward.1} parent=11 // pred_check
          %p520 = pneg %p309
        $region58: #{erp_encoder_forward.1} parent=11 // pred_check_branch
          %522 = sbr.rel (%p520) target = $region60
        $region59: #{erp_encoder_forward.1} parent=11 // pred_region
          %524 = vsyncadd [#allocation15], 0
          %s526 = sshll.u32 %s12, 4
          %s527 = int_to_ptr.hbm [resolvable:$true] %s526
          %s528 = sshll.u32 [#allocation16], 4
          %s529 = int_to_ptr.vmem [resolvable:$true] %s528
          %531 = dma.hbm_to_vmem [thread:$0]  %s527, 16, %s529, [#allocation15]
        $region60: #{erp_encoder_forward.1} parent=11 // pred_fallthru
          _
        // Predicated region
        $region61: #{erp_encoder_forward.1} parent=11 // pred_check
          %p532 = pneg %p330
        $region62: #{erp_encoder_forward.1} parent=11 // pred_check_branch
          %534 = sbr.rel (%p532) target = $region64
        $region63: #{erp_encoder_forward.1} parent=11 // pred_region
          _
        $region64: #{erp_encoder_forward.1} parent=11 // pred_fallthru
          _
        // Predicated region
        $region65: #{erp_encoder_forward.1} parent=11 // pred_check
          %p535 = pneg %p351
        $region66: #{erp_encoder_forward.1} parent=11 // pred_check_branch
          %537 = sbr.rel (%p535) target = $region68
        $region67: #{erp_encoder_forward.1} parent=11 // pred_region
          _
        $region68: #{erp_encoder_forward.1} parent=11 // pred_fallthru
          _
        // Predicated region
        $region69: #{erp_encoder_forward.1} parent=11 // pred_check
          %p538 = pneg %p372
        $region70: #{erp_encoder_forward.1} parent=11 // pred_check_branch
          %540 = sbr.rel (%p538) target = $region72
        $region71: #{erp_encoder_forward.1} parent=11 // pred_region
          %542 = vsyncadd [#allocation18], 0
          %s544 = sshll.u32 %s15, 4
          %s545 = int_to_ptr.hbm [resolvable:$true] %s544
          %s546 = sshll.u32 [#allocation17], 4
          %s547 = int_to_ptr.vmem [resolvable:$true] %s546
          %549 = dma.hbm_to_vmem [thread:$0]  %s545, 16, %s547, [#allocation18]
        $region72: #{erp_encoder_forward.1} parent=11 // pred_fallthru
          _
      $region12: #{erp_encoder_forward.1} parent=5 // pred_fallthru
        _
      %p550 = scmp.lt.s32.totalorder %s31, 2
      // Predicated region
      $region73: #{erp_encoder_forward.1} parent=5 // pred_check
        %p551 = pneg %p550
      $region74: #{erp_encoder_forward.1} parent=5 // pred_check_branch
        %553 = sbr.rel (%p551) target = $region76
      $region75: #{erp_encoder_forward.1} parent=5 // pred_region
        // Predicated region
        $region77: #{erp_encoder_forward.1} parent=75 // pred_check
          %p554 = pneg %p51
        $region78: #{erp_encoder_forward.1} parent=75 // pred_check_branch
          %556 = sbr.rel (%p554) target = $region80
        $region79: #{erp_encoder_forward.1} parent=75 // pred_region
          %p557 = scmp.lt.s32.totalorder %s31, 1
          %s558 = scalar_select %p557, %s31, 1
          %s559 = smul.addr %s558, 8
          %s560 = scalar_lea.vmem %s0, %s559
        $region80: #{erp_encoder_forward.1} parent=75 // pred_fallthru
          _
      $region76: #{erp_encoder_forward.1} parent=5 // pred_fallthru
        _
      %p561 = scmp.le.s32.totalorder 1, %s31
      %p562 = scmp.lt.s32.totalorder %s31, 3
      %p563 = pnand %p561, %p562
      %p564 = pneg %p563
      // Predicated region
      $region81: #{erp_encoder_forward.1} parent=5 // pred_check
        _
      $region82: #{erp_encoder_forward.1} parent=5 // pred_check_branch
        %566 = sbr.rel (%p563) target = $region84
      $region83: #{erp_encoder_forward.1} parent=5 // pred_region
        %s567 = ssub.s32 %s31, 1
        // Predicated region
        $region85: #{erp_encoder_forward.1} parent=83 // pred_check
          %p568 = pneg %p99
        $region86: #{erp_encoder_forward.1} parent=83 // pred_check_branch
          %570 = sbr.rel (%p568) target = $region88
        $region87: #{erp_encoder_forward.1} parent=83 // pred_region
          %572 = dma.done [#allocation3], 16
        $region88: #{erp_encoder_forward.1} parent=83 // pred_fallthru
          _
        // Predicated region
        $region89: #{erp_encoder_forward.1} parent=83 // pred_check
          %p573 = pneg %p120
        $region90: #{erp_encoder_forward.1} parent=83 // pred_check_branch
          %575 = sbr.rel (%p573) target = $region92
        $region91: #{erp_encoder_forward.1} parent=83 // pred_region
          %577 = dma.done [#allocation6], 16
        $region92: #{erp_encoder_forward.1} parent=83 // pred_fallthru
          _
        // Predicated region
        $region93: #{erp_encoder_forward.1} parent=83 // pred_check
          %p578 = pneg %p162
        $region94: #{erp_encoder_forward.1} parent=83 // pred_check_branch
          %580 = sbr.rel (%p578) target = $region96
        $region95: #{erp_encoder_forward.1} parent=83 // pred_region
          %582 = dma.done [#allocation6], 16
        $region96: #{erp_encoder_forward.1} parent=83 // pred_fallthru
          _
        // Predicated region
        $region97: #{erp_encoder_forward.1} parent=83 // pred_check
          %p583 = pneg %p183
        $region98: #{erp_encoder_forward.1} parent=83 // pred_check_branch
          %585 = sbr.rel (%p583) target = $region100
        $region99: #{erp_encoder_forward.1} parent=83 // pred_region
          %587 = dma.done [#allocation9], 16
        $region100: #{erp_encoder_forward.1} parent=83 // pred_fallthru
          _
        // Predicated region
        $region101: #{erp_encoder_forward.1} parent=83 // pred_check
          %p588 = pneg %p204
        $region102: #{erp_encoder_forward.1} parent=83 // pred_check_branch
          %590 = sbr.rel (%p588) target = $region104
        $region103: #{erp_encoder_forward.1} parent=83 // pred_region
          %592 = dma.done [#allocation9], 1024
        $region104: #{erp_encoder_forward.1} parent=83 // pred_fallthru
          _
        // Predicated region
        $region105: #{erp_encoder_forward.1} parent=83 // pred_check
          %p593 = pneg %p225
        $region106: #{erp_encoder_forward.1} parent=83 // pred_check_branch
          %595 = sbr.rel (%p593) target = $region108
        $region107: #{erp_encoder_forward.1} parent=83 // pred_region
          %597 = dma.done [#allocation12], 32
        $region108: #{erp_encoder_forward.1} parent=83 // pred_fallthru
          _
        // Predicated region
        $region109: #{erp_encoder_forward.1} parent=83 // pred_check
          %p598 = pneg %p246
        $region110: #{erp_encoder_forward.1} parent=83 // pred_check_branch
          %600 = sbr.rel (%p598) target = $region112
        $region111: #{erp_encoder_forward.1} parent=83 // pred_region
          %602 = dma.done [#allocation12], 32
        $region112: #{erp_encoder_forward.1} parent=83 // pred_fallthru
          _
        // Predicated region
        $region113: #{erp_encoder_forward.1} parent=83 // pred_check
          %p603 = pneg %p288
        $region114: #{erp_encoder_forward.1} parent=83 // pred_check_branch
          %605 = sbr.rel (%p603) target = $region116
        $region115: #{erp_encoder_forward.1} parent=83 // pred_region
          %607 = dma.done [#allocation15], 16
        $region116: #{erp_encoder_forward.1} parent=83 // pred_fallthru
          _
        // Predicated region
        $region117: #{erp_encoder_forward.1} parent=83 // pred_check
          %p608 = pneg %p309
        $region118: #{erp_encoder_forward.1} parent=83 // pred_check_branch
          %610 = sbr.rel (%p608) target = $region120
        $region119: #{erp_encoder_forward.1} parent=83 // pred_region
          %612 = dma.done [#allocation15], 16
        $region120: #{erp_encoder_forward.1} parent=83 // pred_fallthru
          _
        // Predicated region
        $region121: #{erp_encoder_forward.1} parent=83 // pred_check
          %p613 = pneg %p372
        $region122: #{erp_encoder_forward.1} parent=83 // pred_check_branch
          %615 = sbr.rel (%p613) target = $region124
        $region123: #{erp_encoder_forward.1} parent=83 // pred_region
          %617 = dma.done [#allocation18], 16
        $region124: #{erp_encoder_forward.1} parent=83 // pred_fallthru
          _
        %p618 = scmp.lt.s32.totalorder %s36, 1
        %s619 = scalar_select %p618, %s36, 1
        %s620 = smul.addr %s619, 8
        %s621 = scalar_lea.vmem %s0, %s620
        %p622 = pneg %p57
        %p623 = pneg %p54
        %p624 = pneg %p78
        %p625 = pneg %p75
        %p626 = pneg %p99
        %p627 = pneg %p96
        %p628 = pneg %p120
        %p629 = pneg %p117
        %p630 = pneg %p141
        %p631 = pneg %p138
        %p632 = pneg %p162
        %p633 = pneg %p159
        %p634 = pneg %p183
        %p635 = pneg %p180
        %p636 = pneg %p204
        %p637 = pneg %p201
        %p638 = pneg %p225
        %p639 = pneg %p222
        %p640 = pneg %p246
        %p641 = pneg %p243
        %p642 = pneg %p267
        %p643 = pneg %p264
        %p644 = pneg %p288
        %p645 = pneg %p285
        %p646 = pneg %p309
        %p647 = pneg %p306
        %p648 = pneg %p330
        %p649 = pneg %p327
        %p650 = pneg %p351
        %p651 = pneg %p348
        %p652 = pneg %p372
        %p653 = pneg %p369
        %p654 = pneg %p398
        %p655 = pneg %p395
        %s656 = sand.u32 %s385, 1
        %s657 = scalar_lea.sflag [#allocation4], %s656
        %s658 = sand.u32 %s385, 1
        %s659 = scalar_lea.vmem [#allocation19], %s658
        %p660 = scmp.lt.s32.totalorder %s36, 1
        %s661 = scalar_select %p660, %s36, 1
        %s662 = smul.addr %s661, 8
        %s663 = scalar_lea.vmem %s0, %s662
        %v665 = vld [vmem:[%s663] sm:$0xff]
        %v666 = vpack.c.bf16 %v665, %v665
        %v667 = vld [vmem:[%s1] sm:$0xf]
        %v668 = vld [vmem:[%s1 + $0x4] sm:$0xf]
        %v671 = vunpack.c.l.b16 %v667
        %v672 = vunpack.c.l.b16 %v668
        %v673 = vpack.c.b16 %v672, %v671
        %vm675 = vcmask 130048
        %v677 = vsel %vm675, %v666, 0
        %679 = vmatpush.bf16.msra.mxu0 0
        %680 = vmatpush.bf16.msra.mxu0 0
        %681 = vmatpush.bf16.msra.mxu0 0
        %682 = vmatpush.bf16.msra.mxu0 0
        %683 = vmatpush.bf16.msra.mxu0 0
        %684 = vmatpush.bf16.msra.mxu0 0
        %685 = vmatpush.bf16.msra.mxu0 0
        %686 = vmatpush.bf16.msra.mxu0 %v673
        %687 = vmatmul.bf16.gmra.mxu0 %v677
        %v688 = vpop.f32.mrf.mxu0
        %v689 = vadd.f32 0.0, %v688
        %v690 = vpop.f32.mrf.mxu0
        %691 = vdwg.mxu0
        %v692 = vld [vmem:[#allocation2] sm:$0x1]
        %v694 = vperm.slane %v692, 0
        %v696 = vmul.f32 %v689, %v694
        %v697 = vld [vmem:[#allocation5] sm:$0x1]
        %v699 = vperm.slane %v697, 0
        %v701 = vadd.f32 %v696, %v699
        %v702 = vmul.f32 %v701, 0.1
        %v703 = vmax.f32 %v701, %v702
        %v704 = vpack.c.bf16 %v703, %v703
        %v705 = vld [vmem:[%s4] sm:$0xf]
        %v706 = vld [vmem:[%s4 + $0x4] sm:$0xf]
        %v707 = vld [vmem:[%s4 + $0x8] sm:$0xf]
        %v708 = vld [vmem:[%s4 + $0xc] sm:$0xf]
        %v709 = vld [vmem:[%s4 + $0x10] sm:$0xf]
        %v710 = vld [vmem:[%s4 + $0x14] sm:$0xf]
        %v711 = vld [vmem:[%s4 + $0x18] sm:$0xf]
        %v712 = vld [vmem:[%s4 + $0x1c] sm:$0xf]
        %v713 = vld [vmem:[%s4 + $0x20] sm:$0xf]
        %v714 = vld [vmem:[%s4 + $0x24] sm:$0xf]
        %v715 = vld [vmem:[%s4 + $0x28] sm:$0xf]
        %v716 = vld [vmem:[%s4 + $0x2c] sm:$0xf]
        %v717 = vld [vmem:[%s4 + $0x30] sm:$0xf]
        %v718 = vld [vmem:[%s4 + $0x34] sm:$0xf]
        %v719 = vld [vmem:[%s4 + $0x38] sm:$0xf]
        %v720 = vld [vmem:[%s4 + $0x3c] sm:$0xf]
        %v737 = vunpack.c.l.b16 %v705
        %v738 = vunpack.c.l.b16 %v706
        %v739 = vunpack.c.l.b16 %v707
        %v740 = vunpack.c.l.b16 %v708
        %v741 = vunpack.c.l.b16 %v709
        %v742 = vunpack.c.l.b16 %v710
        %v743 = vunpack.c.l.b16 %v711
        %v744 = vunpack.c.l.b16 %v712
        %v745 = vunpack.c.l.b16 %v713
        %v746 = vunpack.c.l.b16 %v714
        %v747 = vunpack.c.l.b16 %v715
        %v748 = vunpack.c.l.b16 %v716
        %v749 = vunpack.c.l.b16 %v717
        %v750 = vunpack.c.l.b16 %v718
        %v751 = vunpack.c.l.b16 %v719
        %v752 = vunpack.c.l.b16 %v720
        %v753 = vpack.c.b16 %v738, %v737
        %v754 = vpack.c.b16 %v740, %v739
        %v755 = vpack.c.b16 %v742, %v741
        %v756 = vpack.c.b16 %v744, %v743
        %v757 = vpack.c.b16 %v746, %v745
        %v758 = vpack.c.b16 %v748, %v747
        %v759 = vpack.c.b16 %v750, %v749
        %v760 = vpack.c.b16 %v752, %v751
        %769 = vmatpush.bf16.msra.mxu0 %v760
        %770 = vmatpush.bf16.msra.mxu0 %v759
        %771 = vmatpush.bf16.msra.mxu0 %v758
        %772 = vmatpush.bf16.msra.mxu0 %v757
        %773 = vmatpush.bf16.msra.mxu0 %v756
        %774 = vmatpush.bf16.msra.mxu0 %v755
        %775 = vmatpush.bf16.msra.mxu0 %v754
        %776 = vmatpush.bf16.msra.mxu0 %v753
        %777 = vmatmul.bf16.gmra.mxu0 %v704
        %v778 = vpop.f32.mrf.mxu0
        %v779 = vadd.f32 0.0, %v778
        %v780 = vpop.f32.mrf.mxu0
        %781 = vdwg.mxu0
        %v782 = vld [vmem:[#allocation7] sm:$0x1]
        %v784 = vperm.slane %v782, 0
        %v786 = vmul.f32 %v779, %v784
        %v787 = vld [vmem:[#allocation8] sm:$0x1]
        %v789 = vperm.slane %v787, 0
        %v791 = vadd.f32 %v786, %v789
        %v792 = vmul.f32 %v791, 0.1
        %v793 = vmax.f32 %v791, %v792
        %v794 = vpack.c.bf16 %v793, %v793
        %v795 = vld [vmem:[#allocation10] sm:$0xff]
        %v796 = vld [vmem:[#allocation10 + $0x8] sm:$0xff]
        %v797 = vld [vmem:[#allocation10 + $0x10] sm:$0xff]
        %v798 = vld [vmem:[#allocation10 + $0x18] sm:$0xff]
        %v799 = vld [vmem:[#allocation10 + $0x20] sm:$0xff]
        %v800 = vld [vmem:[#allocation10 + $0x28] sm:$0xff]
        %v801 = vld [vmem:[#allocation10 + $0x30] sm:$0xff]
        %v802 = vld [vmem:[#allocation10 + $0x38] sm:$0xff]
        %v811 = vunpack.c.l.b16 %v795
        %v812 = vunpack.c.h.b16 %v795
        %v813 = vunpack.c.l.b16 %v796
        %v814 = vunpack.c.h.b16 %v796
        %v815 = vunpack.c.l.b16 %v797
        %v816 = vunpack.c.h.b16 %v797
        %v817 = vunpack.c.l.b16 %v798
        %v818 = vunpack.c.h.b16 %v798
        %v819 = vunpack.c.l.b16 %v799
        %v820 = vunpack.c.h.b16 %v799
        %v821 = vunpack.c.l.b16 %v800
        %v822 = vunpack.c.h.b16 %v800
        %v823 = vunpack.c.l.b16 %v801
        %v824 = vunpack.c.h.b16 %v801
        %v825 = vunpack.c.l.b16 %v802
        %v826 = vunpack.c.h.b16 %v802
        %v827 = vpack.c.b16 %v813, %v811
        %v828 = vpack.c.b16 %v814, %v812
        %v829 = vpack.c.b16 %v817, %v815
        %v830 = vpack.c.b16 %v818, %v816
        %v831 = vpack.c.b16 %v821, %v819
        %v832 = vpack.c.b16 %v822, %v820
        %v833 = vpack.c.b16 %v825, %v823
        %v834 = vpack.c.b16 %v826, %v824
        %vm843 = vcmask 523264
        %v845 = vsel %vm843, %v794, 0
        %847 = vmatpush.bf16.msra.mxu0 0
        %848 = vmatpush.bf16.msra.mxu0 0
        %849 = vmatpush.bf16.msra.mxu0 0
        %850 = vmatpush.bf16.msra.mxu0 0
        %851 = vmatpush.bf16.msra.mxu0 %v833
        %852 = vmatpush.bf16.msra.mxu0 %v831
        %853 = vmatpush.bf16.msra.mxu0 %v829
        %854 = vmatpush.bf16.msra.mxu0 %v827
        %855 = vmatmul.bf16.gmra.mxu0 %v845
        %v856 = vpop.f32.mrf.mxu0
        %v857 = vadd.f32 0.0, %v856
        %v858 = vpop.f32.mrf.mxu0
        %859 = vdwg.mxu0
        %860 = vmatpush.bf16.msra.mxu0 0
        %861 = vmatpush.bf16.msra.mxu0 0
        %862 = vmatpush.bf16.msra.mxu0 0
        %863 = vmatpush.bf16.msra.mxu0 0
        %864 = vmatpush.bf16.msra.mxu0 %v834
        %865 = vmatpush.bf16.msra.mxu0 %v832
        %866 = vmatpush.bf16.msra.mxu0 %v830
        %867 = vmatpush.bf16.msra.mxu0 %v828
        %868 = vmatmul.bf16.gmra.mxu0 %v845
        %v869 = vpop.f32.mrf.mxu0
        %v870 = vadd.f32 0.0, %v869
        %v871 = vpop.f32.mrf.mxu0
        %872 = vdwg.mxu0
        %v873 = vld [vmem:[#allocation11] sm:$0x3]
        %v875 = vperm.slane %v873, 0
        %v876 = vperm.slane %v873, 1
        %v879 = vmul.f32 %v857, %v875
        %v880 = vmul.f32 %v870, %v876
        %v881 = vld [vmem:[#allocation13] sm:$0x3]
        %v883 = vperm.slane %v881, 0
        %v884 = vperm.slane %v881, 1
        %v887 = vadd.f32 %v879, %v883
        %v888 = vadd.f32 %v880, %v884
        %v889 = vmul.f32 %v887, 0.1
        %v890 = vmul.f32 %v888, 0.1
        %v891 = vmax.f32 %v887, %v889
        %v892 = vmax.f32 %v888, %v890
        %v893 = vpack.c.bf16 %v891, %v891
        %v894 = vpack.c.bf16 %v892, %v892
        %v895 = vld [vmem:[%s10] sm:$0xf]
        %v896 = vld [vmem:[%s10 + $0x4] sm:$0xf]
        %v897 = vld [vmem:[%s10 + $0x8] sm:$0xf]
        %v898 = vld [vmem:[%s10 + $0xc] sm:$0xf]
        %v899 = vld [vmem:[%s10 + $0x10] sm:$0xf]
        %v900 = vld [vmem:[%s10 + $0x14] sm:$0xf]
        %v901 = vld [vmem:[%s10 + $0x18] sm:$0xf]
        %v902 = vld [vmem:[%s10 + $0x1c] sm:$0xf]
        %v903 = vld [vmem:[%s10 + $0x20] sm:$0xf]
        %v904 = vld [vmem:[%s10 + $0x24] sm:$0xf]
        %v905 = vld [vmem:[%s10 + $0x28] sm:$0xf]
        %v906 = vld [vmem:[%s10 + $0x2c] sm:$0xf]
        %v907 = vld [vmem:[%s10 + $0x30] sm:$0xf]
        %v908 = vld [vmem:[%s10 + $0x34] sm:$0xf]
        %v909 = vld [vmem:[%s10 + $0x38] sm:$0xf]
        %v910 = vld [vmem:[%s10 + $0x3c] sm:$0xf]
        %v911 = vld [vmem:[%s10 + $0x40] sm:$0xf]
        %v912 = vld [vmem:[%s10 + $0x44] sm:$0xf]
        %v913 = vld [vmem:[%s10 + $0x48] sm:$0xf]
        %v914 = vld [vmem:[%s10 + $0x4c] sm:$0xf]
        %v915 = vld [vmem:[%s10 + $0x50] sm:$0xf]
        %v916 = vld [vmem:[%s10 + $0x54] sm:$0xf]
        %v917 = vld [vmem:[%s10 + $0x58] sm:$0xf]
        %v918 = vld [vmem:[%s10 + $0x5c] sm:$0xf]
        %v919 = vld [vmem:[%s10 + $0x60] sm:$0xf]
        %v920 = vld [vmem:[%s10 + $0x64] sm:$0xf]
        %v921 = vld [vmem:[%s10 + $0x68] sm:$0xf]
        %v922 = vld [vmem:[%s10 + $0x6c] sm:$0xf]
        %v923 = vld [vmem:[%s10 + $0x70] sm:$0xf]
        %v924 = vld [vmem:[%s10 + $0x74] sm:$0xf]
        %v925 = vld [vmem:[%s10 + $0x78] sm:$0xf]
        %v926 = vld [vmem:[%s10 + $0x7c] sm:$0xf]
        %v959 = vunpack.c.l.b16 %v895
        %v960 = vunpack.c.l.b16 %v896
        %v961 = vunpack.c.l.b16 %v897
        %v962 = vunpack.c.l.b16 %v898
        %v963 = vunpack.c.l.b16 %v899
        %v964 = vunpack.c.l.b16 %v900
        %v965 = vunpack.c.l.b16 %v901
        %v966 = vunpack.c.l.b16 %v902
        %v967 = vunpack.c.l.b16 %v903
        %v968 = vunpack.c.l.b16 %v904
        %v969 = vunpack.c.l.b16 %v905
        %v970 = vunpack.c.l.b16 %v906
        %v971 = vunpack.c.l.b16 %v907
        %v972 = vunpack.c.l.b16 %v908
        %v973 = vunpack.c.l.b16 %v909
        %v974 = vunpack.c.l.b16 %v910
        %v975 = vunpack.c.l.b16 %v911
        %v976 = vunpack.c.l.b16 %v912
        %v977 = vunpack.c.l.b16 %v913
        %v978 = vunpack.c.l.b16 %v914
        %v979 = vunpack.c.l.b16 %v915
        %v980 = vunpack.c.l.b16 %v916
        %v981 = vunpack.c.l.b16 %v917
        %v982 = vunpack.c.l.b16 %v918
        %v983 = vunpack.c.l.b16 %v919
        %v984 = vunpack.c.l.b16 %v920
        %v985 = vunpack.c.l.b16 %v921
        %v986 = vunpack.c.l.b16 %v922
        %v987 = vunpack.c.l.b16 %v923
        %v988 = vunpack.c.l.b16 %v924
        %v989 = vunpack.c.l.b16 %v925
        %v990 = vunpack.c.l.b16 %v926
        %v991 = vpack.c.b16 %v960, %v959
        %v992 = vpack.c.b16 %v962, %v961
        %v993 = vpack.c.b16 %v964, %v963
        %v994 = vpack.c.b16 %v966, %v965
        %v995 = vpack.c.b16 %v968, %v967
        %v996 = vpack.c.b16 %v970, %v969
        %v997 = vpack.c.b16 %v972, %v971
        %v998 = vpack.c.b16 %v974, %v973
        %v999 = vpack.c.b16 %v976, %v975
        %v1000 = vpack.c.b16 %v978, %v977
        %v1001 = vpack.c.b16 %v980, %v979
        %v1002 = vpack.c.b16 %v982, %v981
        %v1003 = vpack.c.b16 %v984, %v983
        %v1004 = vpack.c.b16 %v986, %v985
        %v1005 = vpack.c.b16 %v988, %v987
        %v1006 = vpack.c.b16 %v990, %v989
        %1023 = vmatpush.bf16.msra.mxu0 %v998
        %1024 = vmatpush.bf16.msra.mxu0 %v997
        %1025 = vmatpush.bf16.msra.mxu0 %v996
        %1026 = vmatpush.bf16.msra.mxu0 %v995
        %1027 = vmatpush.bf16.msra.mxu0 %v994
        %1028 = vmatpush.bf16.msra.mxu0 %v993
        %1029 = vmatpush.bf16.msra.mxu0 %v992
        %1030 = vmatpush.bf16.msra.mxu0 %v991
        %1031 = vmatmul.bf16.gmra.mxu0 %v893
        %v1032 = vpop.f32.mrf.mxu0
        %v1033 = vadd.f32 0.0, %v1032
        %v1034 = vpop.f32.mrf.mxu0
        %1035 = vdwg.mxu0
        %1036 = vmatpush.bf16.msra.mxu0 %v1006
        %1037 = vmatpush.bf16.msra.mxu0 %v1005
        %1038 = vmatpush.bf16.msra.mxu0 %v1004
        %1039 = vmatpush.bf16.msra.mxu0 %v1003
        %1040 = vmatpush.bf16.msra.mxu0 %v1002
        %1041 = vmatpush.bf16.msra.mxu0 %v1001
        %1042 = vmatpush.bf16.msra.mxu0 %v1000
        %1043 = vmatpush.bf16.msra.mxu0 %v999
        %1044 = vmatmul.bf16.gmra.mxu0 %v894
        %v1045 = vpop.f32.mrf.mxu0
        %v1046 = vadd.f32 %v1033, %v1045
        %v1047 = vpop.f32.mrf.mxu0
        %1048 = vdwg.mxu0
        %v1049 = vld [vmem:[#allocation14] sm:$0x1]
        %v1051 = vperm.slane %v1049, 0
        %v1053 = vmul.f32 %v1046, %v1051
        %v1054 = vld [vmem:[#allocation16] sm:$0x1]
        %v1056 = vperm.slane %v1054, 0
        %v1058 = vadd.f32 %v1053, %v1056
        %v1059 = vmul.f32 %v1058, 0.1
        %v1060 = vmax.f32 %v1058, %v1059
        %v1061 = vpack.c.bf16 %v1060, %v1060
        %v1062 = vld [vmem:[%s13] sm:$0xf]
        %v1063 = vld [vmem:[%s13 + $0x4] sm:$0xf]
        %v1064 = vld [vmem:[%s13 + $0x8] sm:$0xf]
        %v1065 = vld [vmem:[%s13 + $0xc] sm:$0xf]
        %v1066 = vld [vmem:[%s13 + $0x10] sm:$0xf]
        %v1067 = vld [vmem:[%s13 + $0x14] sm:$0xf]
        %v1068 = vld [vmem:[%s13 + $0x18] sm:$0xf]
        %v1069 = vld [vmem:[%s13 + $0x1c] sm:$0xf]
        %v1070 = vld [vmem:[%s13 + $0x20] sm:$0xf]
        %v1071 = vld [vmem:[%s13 + $0x24] sm:$0xf]
        %v1072 = vld [vmem:[%s13 + $0x28] sm:$0xf]
        %v1073 = vld [vmem:[%s13 + $0x2c] sm:$0xf]
        %v1074 = vld [vmem:[%s13 + $0x30] sm:$0xf]
        %v1075 = vld [vmem:[%s13 + $0x34] sm:$0xf]
        %v1076 = vld [vmem:[%s13 + $0x38] sm:$0xf]
        %v1077 = vld [vmem:[%s13 + $0x3c] sm:$0xf]
        %v1078 = vld [vmem:[#allocation17] sm:$0x1]
        %v1080 = vperm.slane %v1078, 0
        %v1098 = vunpack.c.l.b16 %v1062
        %v1099 = vunpack.c.l.b16 %v1063
        %v1100 = vunpack.c.l.b16 %v1064
        %v1101 = vunpack.c.l.b16 %v1065
        %v1102 = vunpack.c.l.b16 %v1066
        %v1103 = vunpack.c.l.b16 %v1067
        %v1104 = vunpack.c.l.b16 %v1068
        %v1105 = vunpack.c.l.b16 %v1069
        %v1106 = vunpack.c.l.b16 %v1070
        %v1107 = vunpack.c.l.b16 %v1071
        %v1108 = vunpack.c.l.b16 %v1072
        %v1109 = vunpack.c.l.b16 %v1073
        %v1110 = vunpack.c.l.b16 %v1074
        %v1111 = vunpack.c.l.b16 %v1075
        %v1112 = vunpack.c.l.b16 %v1076
        %v1113 = vunpack.c.l.b16 %v1077
        %v1114 = vpack.c.b16 %v1099, %v1098
        %v1115 = vpack.c.b16 %v1101, %v1100
        %v1116 = vpack.c.b16 %v1103, %v1102
        %v1117 = vpack.c.b16 %v1105, %v1104
        %v1118 = vpack.c.b16 %v1107, %v1106
        %v1119 = vpack.c.b16 %v1109, %v1108
        %v1120 = vpack.c.b16 %v1111, %v1110
        %v1121 = vpack.c.b16 %v1113, %v1112
        %1130 = vmatpush.bf16.msra.mxu0 %v1121
        %1131 = vmatpush.bf16.msra.mxu0 %v1120
        %1132 = vmatpush.bf16.msra.mxu0 %v1119
        %1133 = vmatpush.bf16.msra.mxu0 %v1118
        %1134 = vmatpush.bf16.msra.mxu0 %v1117
        %1135 = vmatpush.bf16.msra.mxu0 %v1116
        %1136 = vmatpush.bf16.msra.mxu0 %v1115
        %1137 = vmatpush.bf16.msra.mxu0 %v1114
        %1138 = vmatmul.bf16.gmra.mxu0 %v1061
        %v1139 = vpop.f32.mrf.mxu0
        %v1140 = vadd.f32 %v1080, %v1139
        %v1141 = vpop.f32.mrf.mxu0
        %1142 = vdwg.mxu0
        %v1143 = vld [vmem:[%s14] sm:$0xff]
        %v1144 = vld [vmem:[%s14 + $0x8] sm:$0xff]
        %v1146 = vsel %vm675, 0.0, 0
        %1148 = vmatpush.msra.mxu0 0.0
        %1149 = vmatpush.msra.mxu0 0.0
        %1150 = vmatpush.msra.mxu0 0.0
        %1151 = vmatpush.msra.mxu0 0.0
        %1152 = vmatpush.msra.mxu0 0.0
        %1153 = vmatpush.msra.mxu0 0.0
        %1154 = vmatpush.msra.mxu0 0.0
        %1155 = vmatpush.msra.mxu0 0.0
        %1156 = vmatpush.msra.mxu0 0.0
        %1157 = vmatpush.msra.mxu0 0.0
        %1158 = vmatpush.msra.mxu0 0.0
        %1159 = vmatpush.msra.mxu0 0.0
        %1160 = vmatpush.msra.mxu0 0.0
        %1161 = vmatpush.msra.mxu0 0.0
        %1162 = vmatpush.msra.mxu0 %v1144
        %1163 = vmatpush.msra.mxu0 %v1143
        %1164 = vmatmul.f32.gmra.mxu0 %v1146
        %v1165 = vpop.f32.mrf.mxu0
        %v1166 = vadd.f32 0.0, %v1165
        %1167 = vdwg.mxu0
        %v1168 = vadd.f32 %v1140, %v1166
        %v1169 = vxor.u32 %v1168, 2147483648
        %v1170 = vmul.f32 %v1169, 1.442695
        %v1171 = vpow.pop %v1170
        %v1172 = vadd.f32 %v1171, 1.0
        %v1173 = vrcp.pop %v1172
        %v1174 = vmul.f32 %v1172, %v1173
        %v1175 = vsub.f32 1.0, %v1174
        %v1176 = vmul.f32 %v1173, %v1175
        %v1177 = vadd.f32 %v1173, %v1176
        %vm1178 = vweird.f32 %v1172
        %vm1179 = vweird.f32 %v1173
        %vm1180 = vmor %vm1178, %vm1179
        %v1181 = vsel %vm1180, %v1173, %v1177
        %v1182 = vand.u32 2147483647, %v1172
        %vm1183 = vcmp.eq.f32.partialorder %v1182, 8.507059e+37
        %v1184 = vand.u32 %v1172, 2147483648
        %v1185 = vor.u32 1.1754944e-38, %v1184
        %v1186 = vsel %vm1183, %v1185, %v1181
        %v1187 = vmul.f32 1.0, %v1186
        %v1188 = vtanh.pop %v1168
        %v1189 = vmul.f32 %v1187, 0.0
        %1191 = vrot.lane.b32.xlu0 %v1188, 96
        %v1192 = vpop.permute.xlu0 %1191
        %v1194 = vmul.f32 %v1187, %v1192
        %1196 = vrot.lane.b32.xlu0 %v1194, 16
        %v1197 = vpop.permute.xlu0 %1196
        %v1199 = vadd.f32 %v1189, %v1197
        %v1200 = vtanh.pop %v1199
        %1202 = vrot.lane.b32.xlu0 %v1200, 32
        %v1203 = vpop.permute.xlu0 %1202
        %v1205 = vmul.f32 %v1187, %v1203
        %1207 = vrot.lane.b32.xlu0 %v1205, 80
        %v1208 = vpop.permute.xlu0 %1207
        %v1209 = vsel %vm675, %v1208, 0
        %1211 = vmatpush.msra.mxu0 0.0
        %1212 = vmatpush.msra.mxu0 0.0
        %1213 = vmatpush.msra.mxu0 0.0
        %1214 = vmatpush.msra.mxu0 0.0
        %1215 = vmatpush.msra.mxu0 0.0
        %1216 = vmatpush.msra.mxu0 0.0
        %1217 = vmatpush.msra.mxu0 0.0
        %1218 = vmatpush.msra.mxu0 0.0
        %1219 = vmatpush.msra.mxu0 0.0
        %1220 = vmatpush.msra.mxu0 0.0
        %1221 = vmatpush.msra.mxu0 0.0
        %1222 = vmatpush.msra.mxu0 0.0
        %1223 = vmatpush.msra.mxu0 0.0
        %1224 = vmatpush.msra.mxu0 0.0
        %1225 = vmatpush.msra.mxu0 %v1144
        %1226 = vmatpush.msra.mxu0 %v1143
        %1227 = vmatmul.f32.gmra.mxu0 %v1209
        %v1228 = vpop.f32.mrf.mxu0
        %v1229 = vadd.f32 0.0, %v1228
        %1230 = vdwg.mxu0
        %v1232 = vrot.slane %v1229, 7
        %v1234 = vadd.f32 %v1140, %v1232
        %v1235 = vxor.u32 %v1234, 2147483648
        %v1236 = vmul.f32 %v1235, 1.442695
        %v1237 = vpow.pop %v1236
        %v1238 = vadd.f32 %v1237, 1.0
        %v1239 = vrcp.pop %v1238
        %v1240 = vmul.f32 %v1238, %v1239
        %v1241 = vsub.f32 1.0, %v1240
        %v1242 = vmul.f32 %v1239, %v1241
        %v1243 = vadd.f32 %v1239, %v1242
        %vm1244 = vweird.f32 %v1238
        %vm1245 = vweird.f32 %v1239
        %vm1246 = vmor %vm1244, %vm1245
        %v1247 = vsel %vm1246, %v1239, %v1243
        %v1248 = vand.u32 2147483647, %v1238
        %vm1249 = vcmp.eq.f32.partialorder %v1248, 8.507059e+37
        %v1250 = vand.u32 %v1238, 2147483648
        %v1251 = vor.u32 1.1754944e-38, %v1250
        %v1252 = vsel %vm1249, %v1251, %v1247
        %v1253 = vmul.f32 1.0, %v1252
        %v1254 = vtanh.pop %v1234
        %v1256 = vrot.slane %v1199, 7
        %v1258 = vmul.f32 %v1253, %v1256
        %1260 = vrot.lane.b32.xlu0 %v1254, 96
        %v1261 = vpop.permute.xlu0 %1260
        %v1263 = vmul.f32 %v1253, %v1261
        %1265 = vrot.lane.b32.xlu0 %v1263, 16
        %v1266 = vpop.permute.xlu0 %1265
        %v1268 = vadd.f32 %v1258, %v1266
        %v1269 = vtanh.pop %v1268
        %1271 = vrot.lane.b32.xlu0 %v1269, 32
        %v1272 = vpop.permute.xlu0 %1271
        %v1274 = vmul.f32 %v1253, %v1272
        %v1276 = vrot.slane %v1274, 1
        %1277 = vrot.lane.b32.xlu0 %v1276, 80
        %v1278 = vpop.permute.xlu0 %1277
        %v1279 = vsel %vm675, %v1278, 0
        %1281 = vmatpush.msra.mxu0 0.0
        %1282 = vmatpush.msra.mxu0 0.0
        %1283 = vmatpush.msra.mxu0 0.0
        %1284 = vmatpush.msra.mxu0 0.0
        %1285 = vmatpush.msra.mxu0 0.0
        %1286 = vmatpush.msra.mxu0 0.0
        %1287 = vmatpush.msra.mxu0 0.0
        %1288 = vmatpush.msra.mxu0 0.0
        %1289 = vmatpush.msra.mxu0 0.0
        %1290 = vmatpush.msra.mxu0 0.0
        %1291 = vmatpush.msra.mxu0 0.0
        %1292 = vmatpush.msra.mxu0 0.0
        %1293 = vmatpush.msra.mxu0 0.0
        %1294 = vmatpush.msra.mxu0 0.0
        %1295 = vmatpush.msra.mxu0 %v1144
        %1296 = vmatpush.msra.mxu0 %v1143
        %1297 = vmatmul.f32.gmra.mxu0 %v1279
        %v1298 = vpop.f32.mrf.mxu0
        %v1299 = vadd.f32 0.0, %v1298
        %1300 = vdwg.mxu0
        %v1302 = vrot.slane %v1299, 6
        %v1304 = vadd.f32 %v1140, %v1302
        %v1305 = vxor.u32 %v1304, 2147483648
        %v1306 = vmul.f32 %v1305, 1.442695
        %v1307 = vpow.pop %v1306
        %v1308 = vadd.f32 %v1307, 1.0
        %v1309 = vrcp.pop %v1308
        %v1310 = vmul.f32 %v1308, %v1309
        %v1311 = vsub.f32 1.0, %v1310
        %v1312 = vmul.f32 %v1309, %v1311
        %v1313 = vadd.f32 %v1309, %v1312
        %vm1314 = vweird.f32 %v1308
        %vm1315 = vweird.f32 %v1309
        %vm1316 = vmor %vm1314, %vm1315
        %v1317 = vsel %vm1316, %v1309, %v1313
        %v1318 = vand.u32 2147483647, %v1308
        %vm1319 = vcmp.eq.f32.partialorder %v1318, 8.507059e+37
        %v1320 = vand.u32 %v1308, 2147483648
        %v1321 = vor.u32 1.1754944e-38, %v1320
        %v1322 = vsel %vm1319, %v1321, %v1317
        %v1323 = vmul.f32 1.0, %v1322
        %v1324 = vtanh.pop %v1304
        %v1326 = vrot.slane %v1268, 7
        %v1328 = vmul.f32 %v1323, %v1326
        %1330 = vrot.lane.b32.xlu0 %v1324, 96
        %v1331 = vpop.permute.xlu0 %1330
        %v1333 = vmul.f32 %v1323, %v1331
        %1335 = vrot.lane.b32.xlu0 %v1333, 16
        %v1336 = vpop.permute.xlu0 %1335
        %v1338 = vadd.f32 %v1328, %v1336
        %v1339 = vtanh.pop %v1338
        %1341 = vrot.lane.b32.xlu0 %v1339, 32
        %v1342 = vpop.permute.xlu0 %1341
        %v1344 = vmul.f32 %v1323, %v1342
        %v1346 = vrot.slane %v1344, 2
        %1347 = vrot.lane.b32.xlu0 %v1346, 80
        %v1348 = vpop.permute.xlu0 %1347
        %v1349 = vsel %vm675, %v1348, 0
        %1351 = vmatpush.msra.mxu0 0.0
        %1352 = vmatpush.msra.mxu0 0.0
        %1353 = vmatpush.msra.mxu0 0.0
        %1354 = vmatpush.msra.mxu0 0.0
        %1355 = vmatpush.msra.mxu0 0.0
        %1356 = vmatpush.msra.mxu0 0.0
        %1357 = vmatpush.msra.mxu0 0.0
        %1358 = vmatpush.msra.mxu0 0.0
        %1359 = vmatpush.msra.mxu0 0.0
        %1360 = vmatpush.msra.mxu0 0.0
        %1361 = vmatpush.msra.mxu0 0.0
        %1362 = vmatpush.msra.mxu0 0.0
        %1363 = vmatpush.msra.mxu0 0.0
        %1364 = vmatpush.msra.mxu0 0.0
        %1365 = vmatpush.msra.mxu0 %v1144
        %1366 = vmatpush.msra.mxu0 %v1143
        %1367 = vmatmul.f32.gmra.mxu0 %v1349
        %v1368 = vpop.f32.mrf.mxu0
        %v1369 = vadd.f32 0.0, %v1368
        %1370 = vdwg.mxu0
        %v1372 = vrot.slane %v1369, 5
        %v1374 = vadd.f32 %v1140, %v1372
        %v1375 = vxor.u32 %v1374, 2147483648
        %v1376 = vmul.f32 %v1375, 1.442695
        %v1377 = vpow.pop %v1376
        %v1378 = vadd.f32 %v1377, 1.0
        %v1379 = vrcp.pop %v1378
        %v1380 = vmul.f32 %v1378, %v1379
        %v1381 = vsub.f32 1.0, %v1380
        %v1382 = vmul.f32 %v1379, %v1381
        %v1383 = vadd.f32 %v1379, %v1382
        %vm1384 = vweird.f32 %v1378
        %vm1385 = vweird.f32 %v1379
        %vm1386 = vmor %vm1384, %vm1385
        %v1387 = vsel %vm1386, %v1379, %v1383
        %v1388 = vand.u32 2147483647, %v1378
        %vm1389 = vcmp.eq.f32.partialorder %v1388, 8.507059e+37
        %v1390 = vand.u32 %v1378, 2147483648
        %v1391 = vor.u32 1.1754944e-38, %v1390
        %v1392 = vsel %vm1389, %v1391, %v1387
        %v1393 = vmul.f32 1.0, %v1392
        %v1394 = vtanh.pop %v1374
        %v1396 = vrot.slane %v1338, 7
        %v1398 = vmul.f32 %v1393, %v1396
        %1400 = vrot.lane.b32.xlu0 %v1394, 96
        %v1401 = vpop.permute.xlu0 %1400
        %v1403 = vmul.f32 %v1393, %v1401
        %1405 = vrot.lane.b32.xlu0 %v1403, 16
        %v1406 = vpop.permute.xlu0 %1405
        %v1408 = vadd.f32 %v1398, %v1406
        %v1409 = vtanh.pop %v1408
        %1411 = vrot.lane.b32.xlu0 %v1409, 32
        %v1412 = vpop.permute.xlu0 %1411
        %v1414 = vmul.f32 %v1393, %v1412
        %v1416 = vrot.slane %v1414, 3
        %1417 = vrot.lane.b32.xlu0 %v1416, 80
        %v1418 = vpop.permute.xlu0 %1417
        %v1419 = vsel %vm675, %v1418, 0
        %1421 = vmatpush.msra.mxu0 0.0
        %1422 = vmatpush.msra.mxu0 0.0
        %1423 = vmatpush.msra.mxu0 0.0
        %1424 = vmatpush.msra.mxu0 0.0
        %1425 = vmatpush.msra.mxu0 0.0
        %1426 = vmatpush.msra.mxu0 0.0
        %1427 = vmatpush.msra.mxu0 0.0
        %1428 = vmatpush.msra.mxu0 0.0
        %1429 = vmatpush.msra.mxu0 0.0
        %1430 = vmatpush.msra.mxu0 0.0
        %1431 = vmatpush.msra.mxu0 0.0
        %1432 = vmatpush.msra.mxu0 0.0
        %1433 = vmatpush.msra.mxu0 0.0
        %1434 = vmatpush.msra.mxu0 0.0
        %1435 = vmatpush.msra.mxu0 %v1144
        %1436 = vmatpush.msra.mxu0 %v1143
        %1437 = vmatmul.f32.gmra.mxu0 %v1419
        %v1438 = vpop.f32.mrf.mxu0
        %v1439 = vadd.f32 0.0, %v1438
        %1440 = vdwg.mxu0
        %v1442 = vrot.slane %v1439, 4
        %v1444 = vadd.f32 %v1140, %v1442
        %v1445 = vxor.u32 %v1444, 2147483648
        %v1446 = vmul.f32 %v1445, 1.442695
        %v1447 = vpow.pop %v1446
        %v1448 = vadd.f32 %v1447, 1.0
        %v1449 = vrcp.pop %v1448
        %v1450 = vmul.f32 %v1448, %v1449
        %v1451 = vsub.f32 1.0, %v1450
        %v1452 = vmul.f32 %v1449, %v1451
        %v1453 = vadd.f32 %v1449, %v1452
        %vm1454 = vweird.f32 %v1448
        %vm1455 = vweird.f32 %v1449
        %vm1456 = vmor %vm1454, %vm1455
        %v1457 = vsel %vm1456, %v1449, %v1453
        %v1458 = vand.u32 2147483647, %v1448
        %vm1459 = vcmp.eq.f32.partialorder %v1458, 8.507059e+37
        %v1460 = vand.u32 %v1448, 2147483648
        %v1461 = vor.u32 1.1754944e-38, %v1460
        %v1462 = vsel %vm1459, %v1461, %v1457
        %v1463 = vmul.f32 1.0, %v1462
        %v1464 = vtanh.pop %v1444
        %v1466 = vrot.slane %v1408, 7
        %v1468 = vmul.f32 %v1463, %v1466
        %1470 = vrot.lane.b32.xlu0 %v1464, 96
        %v1471 = vpop.permute.xlu0 %1470
        %v1473 = vmul.f32 %v1463, %v1471
        %1475 = vrot.lane.b32.xlu0 %v1473, 16
        %v1476 = vpop.permute.xlu0 %1475
        %v1478 = vadd.f32 %v1468, %v1476
        %v1479 = vtanh.pop %v1478
        %1481 = vrot.lane.b32.xlu0 %v1479, 32
        %v1482 = vpop.permute.xlu0 %1481
        %v1484 = vmul.f32 %v1463, %v1482
        %v1486 = vrot.slane %v1484, 4
        %1487 = vrot.lane.b32.xlu0 %v1486, 80
        %v1488 = vpop.permute.xlu0 %1487
        %v1489 = vsel %vm675, %v1488, 0
        %1491 = vmatpush.msra.mxu0 0.0
        %1492 = vmatpush.msra.mxu0 0.0
        %1493 = vmatpush.msra.mxu0 0.0
        %1494 = vmatpush.msra.mxu0 0.0
        %1495 = vmatpush.msra.mxu0 0.0
        %1496 = vmatpush.msra.mxu0 0.0
        %1497 = vmatpush.msra.mxu0 0.0
        %1498 = vmatpush.msra.mxu0 0.0
        %1499 = vmatpush.msra.mxu0 0.0
        %1500 = vmatpush.msra.mxu0 0.0
        %1501 = vmatpush.msra.mxu0 0.0
        %1502 = vmatpush.msra.mxu0 0.0
        %1503 = vmatpush.msra.mxu0 0.0
        %1504 = vmatpush.msra.mxu0 0.0
        %1505 = vmatpush.msra.mxu0 %v1144
        %1506 = vmatpush.msra.mxu0 %v1143
        %1507 = vmatmul.f32.gmra.mxu0 %v1489
        %v1508 = vpop.f32.mrf.mxu0
        %v1509 = vadd.f32 0.0, %v1508
        %1510 = vdwg.mxu0
        %v1512 = vrot.slane %v1509, 3
        %v1514 = vadd.f32 %v1140, %v1512
        %v1515 = vxor.u32 %v1514, 2147483648
        %v1516 = vmul.f32 %v1515, 1.442695
        %v1517 = vpow.pop %v1516
        %v1518 = vadd.f32 %v1517, 1.0
        %v1519 = vrcp.pop %v1518
        %v1520 = vmul.f32 %v1518, %v1519
        %v1521 = vsub.f32 1.0, %v1520
        %v1522 = vmul.f32 %v1519, %v1521
        %v1523 = vadd.f32 %v1519, %v1522
        %vm1524 = vweird.f32 %v1518
        %vm1525 = vweird.f32 %v1519
        %vm1526 = vmor %vm1524, %vm1525
        %v1527 = vsel %vm1526, %v1519, %v1523
        %v1528 = vand.u32 2147483647, %v1518
        %vm1529 = vcmp.eq.f32.partialorder %v1528, 8.507059e+37
        %v1530 = vand.u32 %v1518, 2147483648
        %v1531 = vor.u32 1.1754944e-38, %v1530
        %v1532 = vsel %vm1529, %v1531, %v1527
        %v1533 = vmul.f32 1.0, %v1532
        %v1534 = vtanh.pop %v1514
        %v1536 = vrot.slane %v1478, 7
        %v1538 = vmul.f32 %v1533, %v1536
        %1540 = vrot.lane.b32.xlu0 %v1534, 96
        %v1541 = vpop.permute.xlu0 %1540
        %v1543 = vmul.f32 %v1533, %v1541
        %1545 = vrot.lane.b32.xlu0 %v1543, 16
        %v1546 = vpop.permute.xlu0 %1545
        %v1548 = vadd.f32 %v1538, %v1546
        %v1549 = vtanh.pop %v1548
        %1551 = vrot.lane.b32.xlu0 %v1549, 32
        %v1552 = vpop.permute.xlu0 %1551
        %v1554 = vmul.f32 %v1533, %v1552
        %v1556 = vrot.slane %v1554, 5
        %1557 = vrot.lane.b32.xlu0 %v1556, 80
        %v1558 = vpop.permute.xlu0 %1557
        %v1559 = vsel %vm675, %v1558, 0
        %1561 = vmatpush.msra.mxu0 0.0
        %1562 = vmatpush.msra.mxu0 0.0
        %1563 = vmatpush.msra.mxu0 0.0
        %1564 = vmatpush.msra.mxu0 0.0
        %1565 = vmatpush.msra.mxu0 0.0
        %1566 = vmatpush.msra.mxu0 0.0
        %1567 = vmatpush.msra.mxu0 0.0
        %1568 = vmatpush.msra.mxu0 0.0
        %1569 = vmatpush.msra.mxu0 0.0
        %1570 = vmatpush.msra.mxu0 0.0
        %1571 = vmatpush.msra.mxu0 0.0
        %1572 = vmatpush.msra.mxu0 0.0
        %1573 = vmatpush.msra.mxu0 0.0
        %1574 = vmatpush.msra.mxu0 0.0
        %1575 = vmatpush.msra.mxu0 %v1144
        %1576 = vmatpush.msra.mxu0 %v1143
        %1577 = vmatmul.f32.gmra.mxu0 %v1559
        %v1578 = vpop.f32.mrf.mxu0
        %v1579 = vadd.f32 0.0, %v1578
        %1580 = vdwg.mxu0
        %v1582 = vrot.slane %v1579, 2
        %v1584 = vadd.f32 %v1140, %v1582
        %v1585 = vxor.u32 %v1584, 2147483648
        %v1586 = vmul.f32 %v1585, 1.442695
        %v1587 = vpow.pop %v1586
        %v1588 = vadd.f32 %v1587, 1.0
        %v1589 = vrcp.pop %v1588
        %v1590 = vmul.f32 %v1588, %v1589
        %v1591 = vsub.f32 1.0, %v1590
        %v1592 = vmul.f32 %v1589, %v1591
        %v1593 = vadd.f32 %v1589, %v1592
        %vm1594 = vweird.f32 %v1588
        %vm1595 = vweird.f32 %v1589
        %vm1596 = vmor %vm1594, %vm1595
        %v1597 = vsel %vm1596, %v1589, %v1593
        %v1598 = vand.u32 2147483647, %v1588
        %vm1599 = vcmp.eq.f32.partialorder %v1598, 8.507059e+37
        %v1600 = vand.u32 %v1588, 2147483648
        %v1601 = vor.u32 1.1754944e-38, %v1600
        %v1602 = vsel %vm1599, %v1601, %v1597
        %v1603 = vmul.f32 1.0, %v1602
        %v1604 = vtanh.pop %v1584
        %v1606 = vrot.slane %v1548, 7
        %v1608 = vmul.f32 %v1603, %v1606
        %1610 = vrot.lane.b32.xlu0 %v1604, 96
        %v1611 = vpop.permute.xlu0 %1610
        %v1613 = vmul.f32 %v1603, %v1611
        %1615 = vrot.lane.b32.xlu0 %v1613, 16
        %v1616 = vpop.permute.xlu0 %1615
        %v1618 = vadd.f32 %v1608, %v1616
        %v1619 = vtanh.pop %v1618
        %1621 = vrot.lane.b32.xlu0 %v1619, 32
        %v1622 = vpop.permute.xlu0 %1621
        %v1624 = vmul.f32 %v1603, %v1622
        %v1626 = vrot.slane %v1624, 6
        %1627 = vrot.lane.b32.xlu0 %v1626, 80
        %v1628 = vpop.permute.xlu0 %1627
        %v1629 = vsel %vm675, %v1628, 0
        %1631 = vmatpush.msra.mxu0 0.0
        %1632 = vmatpush.msra.mxu0 0.0
        %1633 = vmatpush.msra.mxu0 0.0
        %1634 = vmatpush.msra.mxu0 0.0
        %1635 = vmatpush.msra.mxu0 0.0
        %1636 = vmatpush.msra.mxu0 0.0
        %1637 = vmatpush.msra.mxu0 0.0
        %1638 = vmatpush.msra.mxu0 0.0
        %1639 = vmatpush.msra.mxu0 0.0
        %1640 = vmatpush.msra.mxu0 0.0
        %1641 = vmatpush.msra.mxu0 0.0
        %1642 = vmatpush.msra.mxu0 0.0
        %1643 = vmatpush.msra.mxu0 0.0
        %1644 = vmatpush.msra.mxu0 0.0
        %1645 = vmatpush.msra.mxu0 %v1144
        %1646 = vmatpush.msra.mxu0 %v1143
        %1647 = vmatmul.f32.gmra.mxu0 %v1629
        %v1648 = vpop.f32.mrf.mxu0
        %v1649 = vadd.f32 0.0, %v1648
        %1650 = vdwg.mxu0
        %v1652 = vrot.slane %v1649, 1
        %v1654 = vadd.f32 %v1140, %v1652
        %v1655 = vxor.u32 %v1654, 2147483648
        %v1656 = vmul.f32 %v1655, 1.442695
        %v1657 = vpow.pop %v1656
        %v1658 = vadd.f32 %v1657, 1.0
        %v1659 = vrcp.pop %v1658
        %v1660 = vmul.f32 %v1658, %v1659
        %v1661 = vsub.f32 1.0, %v1660
        %v1662 = vmul.f32 %v1659, %v1661
        %v1663 = vadd.f32 %v1659, %v1662
        %vm1664 = vweird.f32 %v1658
        %vm1665 = vweird.f32 %v1659
        %vm1666 = vmor %vm1664, %vm1665
        %v1667 = vsel %vm1666, %v1659, %v1663
        %v1668 = vand.u32 2147483647, %v1658
        %vm1669 = vcmp.eq.f32.partialorder %v1668, 8.507059e+37
        %v1670 = vand.u32 %v1658, 2147483648
        %v1671 = vor.u32 1.1754944e-38, %v1670
        %v1672 = vsel %vm1669, %v1671, %v1667
        %v1673 = vmul.f32 1.0, %v1672
        %v1674 = vtanh.pop %v1654
        %v1676 = vrot.slane %v1618, 7
        %v1678 = vmul.f32 %v1673, %v1676
        %1680 = vrot.lane.b32.xlu0 %v1674, 96
        %v1681 = vpop.permute.xlu0 %1680
        %v1683 = vmul.f32 %v1673, %v1681
        %1685 = vrot.lane.b32.xlu0 %v1683, 16
        %v1686 = vpop.permute.xlu0 %1685
        %v1688 = vadd.f32 %v1678, %v1686
        %v1689 = vtanh.pop %v1688
        %1691 = vrot.lane.b32.xlu0 %v1689, 32
        %v1692 = vpop.permute.xlu0 %1691
        %v1694 = vmul.f32 %v1673, %v1692
        %1696 = vrot.lane.b32.xlu0 %v1694, 80
        %v1697 = vpop.permute.xlu0 %1696
        %vm1699 = vcmask 130055
        %1700 = vst.msk [vmem:[%s659 - $0x7] sm:$0x80] %vm1699, %v1697
        %s1701 = sand.u32 %s385, 1
        %s1702 = scalar_lea.sflag [#allocation4], %s1701
        %s1703 = sand.u32 %s385, 1
        %s1704 = scalar_lea.vmem [#allocation19], %s1703
        // Predicated region
        $region125: #{erp_encoder_forward.1} parent=83 // pred_check
          %p1705 = pneg %p395
        $region126: #{erp_encoder_forward.1} parent=83 // pred_check_branch
          %1707 = sbr.rel (%p1705) target = $region128
        $region127: #{erp_encoder_forward.1} parent=83 // pred_region
          %1709 = vsyncadd %s1702, 0
          %s1710 = scalar_lea.hbm %s16, %s36
          %s1712 = sshll.u32 %s1704, 4
          %s1713 = int_to_ptr.vmem [resolvable:$true] %s1712
          %s1714 = sshll.u32 %s1710, 4
          %s1715 = int_to_ptr.hbm [resolvable:$true] %s1714
          %1717 = dma.vmem_to_hbm [thread:$0]  %s1713, 16, %s1715, %s1702
        $region128: #{erp_encoder_forward.1} parent=83 // pred_fallthru
          _
      $region84: #{erp_encoder_forward.1} parent=5 // pred_fallthru
        _
      %p1718 = scmp.le.s32.totalorder 2, %s31
      // Predicated region
      $region129: #{erp_encoder_forward.1} parent=5 // pred_check
        %p1719 = pneg %p1718
      $region130: #{erp_encoder_forward.1} parent=5 // pred_check_branch
        %1721 = sbr.rel (%p1719) target = $region132
      $region131: #{erp_encoder_forward.1} parent=5 // pred_region
        %s1722 = ssub.s32 %s31, 2
        // Predicated region
        $region133: #{erp_encoder_forward.1} parent=131 // pred_check
          %p1723 = pneg %p401
        $region134: #{erp_encoder_forward.1} parent=131 // pred_check_branch
          %1725 = sbr.rel (%p1723) target = $region136
        $region135: #{erp_encoder_forward.1} parent=131 // pred_region
          %s1726 = sand.u32 %s386, 1
          %s1727 = scalar_lea.sflag [#allocation4], %s1726
          %s1728 = sand.u32 %s386, 1
          %s1729 = scalar_lea.vmem [#allocation19], %s1728
          %1731 = dma.done %s1727, 16
        $region136: #{erp_encoder_forward.1} parent=131 // pred_fallthru
          _
      $region132: #{erp_encoder_forward.1} parent=5 // pred_fallthru
        _
    $region6: #{erp_encoder_forward.1} parent=1 // loop_footer
      %s35 = sadd.s32 1, %s31
    $region7: #{erp_encoder_forward.1} parent=1 // loop_footer_branch
      %30 = sbr.rel target = $region3
    $region8: #{erp_encoder_forward.1} parent=1 // loop_exit
      _
    %1732 = vsyncpa [#allocation3], 1
    %s1733 = scalar_lea.sflag [#allocation3], 1
    %1734 = vsyncpa %s1733, 1
    %1735 = vsyncpa [#allocation6], 1
    %1736 = vsyncpa [#allocation9], 1
    %1737 = vsyncpa [#allocation12], 1
    %1738 = vsyncpa [#allocation15], 1
    %1739 = vsyncpa [#allocation18], 1
    %1740 = vsyncpa [#allocation4], 1
    %s1741 = scalar_lea.sflag [#allocation4], 1
    %1742 = vsyncpa %s1741, 1

</llo_original>
